<compile_context>
chip_gen: v5e
topology: v5e:2x2
jax: 0.10.0
libtpu: 0.0.40
codegen_flags: <defaults>
</compile_context>

<pallas_src>
import functools
import math

import jax
import jax.numpy as jnp
from jax.experimental import pallas as pl
from jax.experimental.pallas import tpu as pltpu

# ----------------------------- model hyper-params -----------------------------
EMBED_DIM = 32      # CLIP embed_dim
VIS_WIDTH = 32      # vision trunk width
TXT_WIDTH = 32      # text transformer width
NUM_HEADS = 4
MLP_DIM = 64
PATCH = 4
IMG_SIZE = 16
IMG_CH = 3
VOCAB = 64
SEQ = 8
NUM_PATCHES = (IMG_SIZE // PATCH) ** 2
PATCH_DIM = IMG_CH * PATCH * PATCH

_VMEM = pltpu.MemorySpace.VMEM

# Packed small-parameter slab: one (NUM_SMALL_ROWS, 128) f32 array holding every sub-KB
# bias / LayerNorm vector for BOTH towers (zero-padded rows, sliced with static offsets).
SMALL_LANES = 128
(_VR_PATCH_B, _VR_LN1G, _VR_LN1B, _VR_BQKV, _VR_BO, _VR_LN2G, _VR_LN2B,
 _VR_B1, _VR_B2, _VR_PROJ_B,
 _TR_LN1G, _TR_LN1B, _TR_BQKV, _TR_BO, _TR_LN2G, _TR_LN2B, _TR_B1, _TR_B2) = range(18)
NUM_SMALL_ROWS = 24  # 18 used, padded to a sublane multiple


# --------------------------- in-kernel math helpers ----------------------------
def _layernorm(x, g, b):
    mu = jnp.mean(x, axis=-1, keepdims=True)
    var = jnp.mean((x - mu) ** 2, axis=-1, keepdims=True)
    return (x - mu) * jax.lax.rsqrt(var + 1e-5) * g + b


def _l2_normalize(y):
    # F.normalize(dim=-1, eps=1e-12): y / max(||y||, 1e-12) == y * rsqrt(max(||y||^2, 1e-24))
    return y * jax.lax.rsqrt(jnp.maximum(jnp.sum(y * y, axis=-1, keepdims=True), 1e-24))


def _transformer_block(x, mask_bias, num_heads,
                       ln1_g, ln1_b, wqkv, bqkv, wo, bo,
                       ln2_g, ln2_b, w1, b1, w2, b2):
    """Pre-LN transformer block on VMEM-resident values.

    mask_bias: None or (B, 1, S) additive attention bias.
    The 1/sqrt(dh) attention scale is pre-folded into the Q columns of wqkv / bqkv.
    """
    b, s, w = x.shape
    dh = w // num_heads
    x2 = x.reshape(b * s, w)

    h = _layernorm(x2, ln1_g, ln1_b)
    # One fused (B*S, W) @ (W, 3W) MXU matmul for Q, K, V.
    qkv = jnp.dot(h, wqkv, preferred_element_type=jnp.float32) + bqkv        # (B*S, 3W)

    # Head-major (H*B, S, dh) tensors: static lane slices + leading-dim-only reshapes
    # + one concatenate (all Mosaic-safe).  All heads then share ONE pair of batched
    # MXU einsums — no per-head matmuls.
    def split_heads(off):
        return jnp.concatenate(
            [qkv[:, off + hh * dh: off + (hh + 1) * dh].reshape(1, b * s, dh)
             for hh in range(num_heads)],
            axis=0).reshape(num_heads * b, s, dh)

    qh = split_heads(0)
    kh = split_heads(w)
    vh = split_heads(2 * w)

    sc = jnp.einsum('bqd,bkd->bqk', qh, kh,
                    preferred_element_type=jnp.float32)                       # (H*B, S, S)
    if mask_bias is not None:
        # broadcast the (B, 1, S) bias across heads in-kernel (no HBM repeat)
        sc = sc + jnp.concatenate([mask_bias] * num_heads, axis=0)            # (H*B, 1, S)
    sc = sc - jnp.max(sc, axis=-1, keepdims=True)
    p = jnp.exp(sc)
    # EUP reciprocal for the softmax denominator (approx; tiny deviation from exact softmax).
    p = p * pl.reciprocal(jnp.sum(p, axis=-1, keepdims=True), approx=True)
    oh = jnp.einsum('bqk,bkd->bqd', p, vh,
                    preferred_element_type=jnp.float32)                       # (H*B, S, dh)

    # Merge heads back to (B*S, W) and run ONE (W, W) output projection.
    oh = oh.reshape(num_heads, b * s, dh)
    o2 = jnp.concatenate([oh[hh] for hh in range(num_heads)], axis=-1)        # (B*S, W)
    x2 = x2 + jnp.dot(o2, wo, preferred_element_type=jnp.float32) + bo

    h = _layernorm(x2, ln2_g, ln2_b)
    hmid = jnp.dot(h, w1, preferred_element_type=jnp.float32) + b1
    # TODO(synk): real towers use exact GELU / QuickGELU; tanh-GELU kept for synthetic blocks.
    hmid = jax.nn.gelu(hmid, approximate=True)
    x2 = x2 + jnp.dot(hmid, w2, preferred_element_type=jnp.float32) + b2
    return x2.reshape(b, s, w)


# ------------------------------ fused CLIP kernel ------------------------------
def _clip_towers_kernel(patches_ref, vis_pos_ref, txt_x_ref, txt_mask_ref,
                        patch_w_ref, v_wqkv_ref, v_wo_ref, v_w1_ref, v_w2_ref, v_proj_ref,
                        t_wqkv_ref, t_wo_ref, t_w1_ref, t_w2_ref, t_proj_ref,
                        small_ref,
                        img_o_ref, txt_o_ref, *, num_heads):
    small = small_ref[...]

    def row(r, n):                      # (1, n) slice of the packed small-param slab
        return small[r:r + 1, :n]

    # ---------------- vision tower (TimmModel: trunk -> avg pool -> linear proj) ----------
    bv, n, pd = patches_ref.shape
    wv = patch_w_ref.shape[1]
    x = jnp.dot(patches_ref[...].reshape(bv * n, pd), patch_w_ref[...],
                preferred_element_type=jnp.float32) + row(_VR_PATCH_B, wv)
    x = x.reshape(bv, n, wv) + vis_pos_ref[...]
    x = _transformer_block(
        x, None, num_heads,
        row(_VR_LN1G, wv), row(_VR_LN1B, wv), v_wqkv_ref[...], row(_VR_BQKV, 3 * wv),
        v_wo_ref[...], row(_VR_BO, wv),
        row(_VR_LN2G, wv), row(_VR_LN2B, wv),
        v_w1_ref[...], row(_VR_B1, v_w1_ref.shape[1]),
        v_w2_ref[...], row(_VR_B2, wv))
    pooled = jnp.mean(x, axis=1)                                              # (B, W)
    e = v_proj_ref.shape[1]
    img = jnp.dot(pooled, v_proj_ref[...],
                  preferred_element_type=jnp.float32) + row(_VR_PROJ_B, e)
    img_o_ref[...] = _l2_normalize(img)

    # ---------------- text tower (BERT block -> 'cls' pool -> @ text_projection) ----------
    wt = t_wqkv_ref.shape[0]
    xt = _transformer_block(
        txt_x_ref[...], txt_mask_ref[...], num_heads,
        row(_TR_LN1G, wt), row(_TR_LN1B, wt), t_wqkv_ref[...], row(_TR_BQKV, 3 * wt),
        t_wo_ref[...], row(_TR_BO, wt),
        row(_TR_LN2G, wt), row(_TR_LN2B, wt),
        t_w1_ref[...], row(_TR_B1, t_w1_ref.shape[1]),
        t_w2_ref[...], row(_TR_B2, wt))
    cls = xt[:, 0, :]                                                         # (B, W)
    txt = jnp.dot(cls, t_proj_ref[...], preferred_element_type=jnp.float32)
    txt_o_ref[...] = _l2_normalize(txt)


# ------------------------------- forward wrapper --------------------------------
def extract_patches_nchw(img, patch):
    # TODO(synk): at real (224x224) sizes, patchify inside the kernel (BlockSpec index_map /
    # strided loads) instead of this XLA reshape+transpose HBM round trip.
    b, c, h, w = img.shape
    x = img.reshape(b, c, h // patch, patch, w // patch, patch)
    x = x.transpose(0, 2, 4, 1, 3, 5)            # B, H/p, W/p, C, p, p
    return x.reshape(b, (h // patch) * (w // patch), c * patch * patch)


def clip_forward(kparams, image, token_ids, attention_mask):
    bi = image.shape[0]
    bt = token_ids.shape[0]
    patches = extract_patches_nchw(image, PATCH)                              # (B, N, C*p*p)
    # TODO(synk): token-embedding gather stays in plain JAX (no clean Pallas gather here).
    txt_x = jnp.take(kparams['wte'], token_ids, axis=0) + kparams['txt_pos']  # (B, S, W)
    txt_mask = (1.0 - attention_mask.astype(jnp.float32))[:, None, :] * (-1e9)  # (B, 1, S)

    args = (patches, kparams['vis_pos'], txt_x, txt_mask,
            kparams['patch_w'], kparams['v_wqkv'], kparams['v_wo'],
            kparams['v_w1'], kparams['v_w2'], kparams['v_proj_w'],
            kparams['t_wqkv'], kparams['t_wo'], kparams['t_w1'],
            kparams['t_w2'], kparams['text_projection'],
            kparams['small'])

    img_f, txt_f = pl.pallas_call(
        functools.partial(_clip_towers_kernel, num_heads=NUM_HEADS),
        in_specs=[pl.BlockSpec(memory_space=_VMEM) for _ in args],
        out_specs=(pl.BlockSpec(memory_space=_VMEM),
                   pl.BlockSpec(memory_space=_VMEM)),
        out_shape=(jax.ShapeDtypeStruct((bi, EMBED_DIM), jnp.float32),
                   jax.ShapeDtypeStruct((bt, EMBED_DIM), jnp.float32)),
    )(*args)
    # CLIP.forward returns logit_scale.exp() unclamped.
    return img_f, txt_f, jnp.exp(kparams['logit_scale'])


# ---------------------------------- params -------------------------------------
def make_block_params(key, width, mlp_dim):
    ks = jax.random.split(key, 4)
    std = 0.02
    return dict(
        ln1_g=jnp.ones((width,), jnp.float32),
        ln1_b=jnp.zeros((width,), jnp.float32),
        wqkv=std * jax.random.normal(ks[0], (width, 3 * width), jnp.float32),
        bqkv=jnp.zeros((3 * width,), jnp.float32),
        wo=std * jax.random.normal(ks[1], (width, width), jnp.float32),
        bo=jnp.zeros((width,), jnp.float32),
        ln2_g=jnp.ones((width,), jnp.float32),
        ln2_b=jnp.zeros((width,), jnp.float32),
        w1=std * jax.random.normal(ks[2], (width, mlp_dim), jnp.float32),
        b1=jnp.zeros((mlp_dim,), jnp.float32),
        w2=std * jax.random.normal(ks[3], (mlp_dim, width), jnp.float32),
        b2=jnp.zeros((width,), jnp.float32),
    )


def init_params(key):
    ks = jax.random.split(key, 8)
    return dict(
        # vision tower
        patch_w=0.02 * jax.random.normal(ks[0], (PATCH_DIM, VIS_WIDTH), jnp.float32),
        patch_b=jnp.zeros((VIS_WIDTH,), jnp.float32),
        vis_pos=0.02 * jax.random.normal(ks[1], (1, NUM_PATCHES, VIS_WIDTH), jnp.float32),
        vis_block=make_block_params(ks[2], VIS_WIDTH, MLP_DIM),
        vis_proj_w=0.02 * jax.random.normal(ks[3], (VIS_WIDTH, EMBED_DIM), jnp.float32),
        vis_proj_b=jnp.zeros((EMBED_DIM,), jnp.float32),
        # text tower
        wte=0.02 * jax.random.normal(ks[4], (VOCAB, TXT_WIDTH), jnp.float32),
        txt_pos=0.02 * jax.random.normal(ks[5], (1, SEQ, TXT_WIDTH), jnp.float32),
        txt_block=make_block_params(ks[6], TXT_WIDTH, MLP_DIM),
        # CLIP head params (match CLIP.init_parameters)
        text_projection=(TXT_WIDTH ** -0.5)
        * jax.random.normal(ks[7], (TXT_WIDTH, EMBED_DIM), jnp.float32),
        logit_scale=jnp.asarray(math.log(1.0 / 0.07), jnp.float32),
    )


def _fold_q_scale(wqkv, bqkv, num_heads):
    # Fold the 1/sqrt(dh) attention scale into the Q columns at prep time (zero runtime cost).
    w = wqkv.shape[0]
    dh = w // num_heads
    col_scale = jnp.concatenate(
        [jnp.full((w,), 1.0 / math.sqrt(dh), jnp.float32),
         jnp.ones((2 * w,), jnp.float32)])
    return wqkv * col_scale[None, :], bqkv * col_scale


def _pack_small_rows(rows):
    slab = jnp.zeros((NUM_SMALL_ROWS, SMALL_LANES), jnp.float32)
    for i, r in rows:
        r = jnp.asarray(r, jnp.float32).reshape(-1)
        slab = slab.at[i, :r.shape[0]].set(r)
    return slab


def pack_kernel_params(params):
    """One-time prep: fold the attention scale into Q weights and pack every small
    bias / LayerNorm vector of BOTH towers into a single 128-lane VMEM slab (one DMA)."""
    vb, tb = params['vis_block'], params['txt_block']
    v_wqkv, v_bqkv = _fold_q_scale(vb['wqkv'], vb['bqkv'], NUM_HEADS)
    t_wqkv, t_bqkv = _fold_q_scale(tb['wqkv'], tb['bqkv'], NUM_HEADS)
    small = _pack_small_rows([
        (_VR_PATCH_B, params['patch_b']),
        (_VR_LN1G, vb['ln1_g']), (_VR_LN1B, vb['ln1_b']),
        (_VR_BQKV, v_bqkv), (_VR_BO, vb['bo']),
        (_VR_LN2G, vb['ln2_g']), (_VR_LN2B, vb['ln2_b']),
        (_VR_B1, vb['b1']), (_VR_B2, vb['b2']),
        (_VR_PROJ_B, params['vis_proj_b']),
        (_TR_LN1G, tb['ln1_g']), (_TR_LN1B, tb['ln1_b']),
        (_TR_BQKV, t_bqkv), (_TR_BO, tb['bo']),
        (_TR_LN2G, tb['ln2_g']), (_TR_LN2B, tb['ln2_b']),
        (_TR_B1, tb['b1']), (_TR_B2, tb['b2']),
    ])
    return dict(
        patch_w=params['patch_w'], vis_pos=params['vis_pos'],
        v_wqkv=v_wqkv, v_wo=vb['wo'], v_w1=vb['w1'], v_w2=vb['w2'],
        v_proj_w=params['vis_proj_w'],
        wte=params['wte'], txt_pos=params['txt_pos'],
        t_wqkv=t_wqkv, t_wo=tb['wo'], t_w1=tb['w1'], t_w2=tb['w2'],
        text_projection=params['text_projection'],
        small=small, logit_scale=params['logit_scale'],
    )


# ----------------------------------- main ---------------------------------------
if __name__ == "__main__":
    key = jax.random.PRNGKey(0)
    k_param, k_img, k_txt = jax.random.split(key, 3)

    params = init_params(k_param)
    kparams = pack_kernel_params(params)          # one-time folding + packing

    image = jax.random.normal(k_img, (2, IMG_CH, IMG_SIZE, IMG_SIZE), jnp.float32)
    text = jax.random.randint(k_txt, (2, SEQ), 0, VOCAB, dtype=jnp.int32)
    text_attention_mask = jnp.array(
        [[1, 1, 1, 1, 1, 1, 1, 1],
         [1, 1, 1, 1, 1, 1, 0, 0]], dtype=jnp.int32)

    fwd = jax.jit(clip_forward)
    img_f, txt_f, scale = fwd(kparams, image, text, text_attention_mask)
    jax.block_until_ready((img_f, txt_f, scale))

    assert img_f.shape == (2, EMBED_DIM) and txt_f.shape == (2, EMBED_DIM)
    assert bool(jnp.all(jnp.isfinite(img_f))) and bool(jnp.all(jnp.isfinite(txt_f)))
    assert bool(jnp.isfinite(scale))
    print("KERNEL_OK")
</pallas_src>

<mosaic_0001>
module attributes {stable_mosaic.version = 11 : i64} {
  func.func @_clip_towers_kernel(%arg0: memref<2x16x48xf32, #tpu.memory_space<vmem>>, %arg1: memref<1x16x32xf32, #tpu.memory_space<vmem>>, %arg2: memref<2x8x32xf32, #tpu.memory_space<vmem>>, %arg3: memref<2x1x8xf32, #tpu.memory_space<vmem>>, %arg4: memref<48x32xf32, #tpu.memory_space<vmem>>, %arg5: memref<32x96xf32, #tpu.memory_space<vmem>>, %arg6: memref<32x32xf32, #tpu.memory_space<vmem>>, %arg7: memref<32x64xf32, #tpu.memory_space<vmem>>, %arg8: memref<64x32xf32, #tpu.memory_space<vmem>>, %arg9: memref<32x32xf32, #tpu.memory_space<vmem>>, %arg10: memref<32x96xf32, #tpu.memory_space<vmem>>, %arg11: memref<32x32xf32, #tpu.memory_space<vmem>>, %arg12: memref<32x64xf32, #tpu.memory_space<vmem>>, %arg13: memref<64x32xf32, #tpu.memory_space<vmem>>, %arg14: memref<32x32xf32, #tpu.memory_space<vmem>>, %arg15: memref<24x128xf32, #tpu.memory_space<vmem>>, %arg16: memref<2x32xf32, #tpu.memory_space<vmem>>, %arg17: memref<2x32xf32, #tpu.memory_space<vmem>>) attributes {dimension_semantics = [], scalar_prefetch = 0 : i64, scratch_operands = 0 : i64, tpu.core_type = #tpu.core_type<tc>} {
    %c0 = arith.constant 0 : index
    %c0_0 = arith.constant 0 : index
    %0 = vector.load %arg15[%c0, %c0_0] : memref<24x128xf32, #tpu.memory_space<vmem>>, vector<24x128xf32>
    %c0_1 = arith.constant 0 : index
    %c0_2 = arith.constant 0 : index
    %c0_3 = arith.constant 0 : index
    %1 = vector.load %arg0[%c0_1, %c0_2, %c0_3] : memref<2x16x48xf32, #tpu.memory_space<vmem>>, vector<2x16x48xf32>
    %2 = vector.shape_cast %1 : vector<2x16x48xf32> to vector<32x48xf32>
    %c0_4 = arith.constant 0 : index
    %c0_5 = arith.constant 0 : index
    %3 = vector.load %arg4[%c0_4, %c0_5] : memref<48x32xf32, #tpu.memory_space<vmem>>, vector<48x32xf32>
    %cst = arith.constant dense<0.000000e+00> : vector<32x32xf32>
    %4 = tpu.matmul %2, %3, %cst {dimension_numbers = #tpu.dot_dimension_numbers<[1], [0], [0], [1], [0, 0, 1, 1], [], []>} : vector<32x48xf32>, vector<48x32xf32>, vector<32x32xf32> -> vector<32x32xf32>
    %5 = vector.extract_strided_slice %0 {offsets = [0, 0], sizes = [1, 32], strides = [1, 1]} : vector<24x128xf32> to vector<1x32xf32>
    %6 = vector.broadcast %5 : vector<1x32xf32> to vector<32x32xf32>
    %7 = arith.addf %4, %6 : vector<32x32xf32>
    %8 = vector.shape_cast %7 : vector<32x32xf32> to vector<2x16x32xf32>
    %c0_6 = arith.constant 0 : index
    %c0_7 = arith.constant 0 : index
    %c0_8 = arith.constant 0 : index
    %9 = vector.load %arg1[%c0_6, %c0_7, %c0_8] : memref<1x16x32xf32, #tpu.memory_space<vmem>>, vector<1x16x32xf32>
    %10 = vector.broadcast %9 : vector<1x16x32xf32> to vector<2x16x32xf32>
    %11 = arith.addf %8, %10 : vector<2x16x32xf32>
    %12 = vector.extract_strided_slice %0 {offsets = [1, 0], sizes = [1, 32], strides = [1, 1]} : vector<24x128xf32> to vector<1x32xf32>
    %13 = vector.extract_strided_slice %0 {offsets = [2, 0], sizes = [1, 32], strides = [1, 1]} : vector<24x128xf32> to vector<1x32xf32>
    %c0_9 = arith.constant 0 : index
    %c0_10 = arith.constant 0 : index
    %14 = vector.load %arg5[%c0_9, %c0_10] : memref<32x96xf32, #tpu.memory_space<vmem>>, vector<32x96xf32>
    %15 = vector.extract_strided_slice %0 {offsets = [3, 0], sizes = [1, 96], strides = [1, 1]} : vector<24x128xf32> to vector<1x96xf32>
    %c0_11 = arith.constant 0 : index
    %c0_12 = arith.constant 0 : index
    %16 = vector.load %arg6[%c0_11, %c0_12] : memref<32x32xf32, #tpu.memory_space<vmem>>, vector<32x32xf32>
    %17 = vector.extract_strided_slice %0 {offsets = [4, 0], sizes = [1, 32], strides = [1, 1]} : vector<24x128xf32> to vector<1x32xf32>
    %18 = vector.extract_strided_slice %0 {offsets = [5, 0], sizes = [1, 32], strides = [1, 1]} : vector<24x128xf32> to vector<1x32xf32>
    %19 = vector.extract_strided_slice %0 {offsets = [6, 0], sizes = [1, 32], strides = [1, 1]} : vector<24x128xf32> to vector<1x32xf32>
    %c0_13 = arith.constant 0 : index
    %c0_14 = arith.constant 0 : index
    %20 = vector.load %arg7[%c0_13, %c0_14] : memref<32x64xf32, #tpu.memory_space<vmem>>, vector<32x64xf32>
    %21 = vector.extract_strided_slice %0 {offsets = [7, 0], sizes = [1, 64], strides = [1, 1]} : vector<24x128xf32> to vector<1x64xf32>
    %c0_15 = arith.constant 0 : index
    %c0_16 = arith.constant 0 : index
    %22 = vector.load %arg8[%c0_15, %c0_16] : memref<64x32xf32, #tpu.memory_space<vmem>>, vector<64x32xf32>
    %23 = vector.extract_strided_slice %0 {offsets = [8, 0], sizes = [1, 32], strides = [1, 1]} : vector<24x128xf32> to vector<1x32xf32>
    %24 = vector.shape_cast %11 : vector<2x16x32xf32> to vector<32x32xf32>
    %cst_17 = arith.constant dense<0.000000e+00> : vector<32xf32>
    %25 = vector.multi_reduction <add>, %24, %cst_17 [1] : vector<32x32xf32> to vector<32xf32>
    %26 = vector.shape_cast %25 : vector<32xf32> to vector<32x1xf32>
    %cst_18 = arith.constant 3.200000e+01 : f32
    %27 = vector.broadcast %cst_18 : f32 to vector<32x1xf32>
    %28 = arith.divf %26, %27 : vector<32x1xf32>
    %29 = vector.broadcast %28 : vector<32x1xf32> to vector<32x32xf32>
    %30 = arith.subf %24, %29 : vector<32x32xf32>
    %31 = arith.mulf %30, %30 : vector<32x32xf32>
    %cst_19 = arith.constant dense<0.000000e+00> : vector<32xf32>
    %32 = vector.multi_reduction <add>, %31, %cst_19 [1] : vector<32x32xf32> to vector<32xf32>
    %33 = vector.shape_cast %32 : vector<32xf32> to vector<32x1xf32>
    %cst_20 = arith.constant 3.200000e+01 : f32
    %34 = vector.broadcast %cst_20 : f32 to vector<32x1xf32>
    %35 = arith.divf %33, %34 : vector<32x1xf32>
    %36 = vector.broadcast %28 : vector<32x1xf32> to vector<32x32xf32>
    %37 = arith.subf %24, %36 : vector<32x32xf32>
    %cst_21 = arith.constant 9.99999974E-6 : f32
    %38 = vector.broadcast %cst_21 : f32 to vector<32x1xf32>
    %39 = arith.addf %35, %38 : vector<32x1xf32>
    %40 = math.rsqrt %39 : vector<32x1xf32>
    %41 = vector.broadcast %40 : vector<32x1xf32> to vector<32x32xf32>
    %42 = arith.mulf %37, %41 : vector<32x32xf32>
    %43 = vector.broadcast %12 : vector<1x32xf32> to vector<32x32xf32>
    %44 = arith.mulf %42, %43 : vector<32x32xf32>
    %45 = vector.broadcast %13 : vector<1x32xf32> to vector<32x32xf32>
    %46 = arith.addf %44, %45 : vector<32x32xf32>
    %cst_22 = arith.constant dense<0.000000e+00> : vector<32x96xf32>
    %47 = tpu.matmul %46, %14, %cst_22 {dimension_numbers = #tpu.dot_dimension_numbers<[1], [0], [0], [1], [0, 0, 1, 1], [], []>} : vector<32x32xf32>, vector<32x96xf32>, vector<32x96xf32> -> vector<32x96xf32>
    %48 = vector.broadcast %15 : vector<1x96xf32> to vector<32x96xf32>
    %49 = arith.addf %47, %48 : vector<32x96xf32>
    %50 = vector.extract_strided_slice %49 {offsets = [0, 0], sizes = [32, 8], strides = [1, 1]} : vector<32x96xf32> to vector<32x8xf32>
    %51 = vector.shape_cast %50 : vector<32x8xf32> to vector<1x32x8xf32>
    %52 = vector.extract_strided_slice %49 {offsets = [0, 8], sizes = [32, 8], strides = [1, 1]} : vector<32x96xf32> to vector<32x8xf32>
    %53 = vector.shape_cast %52 : vector<32x8xf32> to vector<1x32x8xf32>
    %54 = vector.extract_strided_slice %49 {offsets = [0, 16], sizes = [32, 8], strides = [1, 1]} : vector<32x96xf32> to vector<32x8xf32>
    %55 = vector.shape_cast %54 : vector<32x8xf32> to vector<1x32x8xf32>
    %56 = vector.extract_strided_slice %49 {offsets = [0, 24], sizes = [32, 8], strides = [1, 1]} : vector<32x96xf32> to vector<32x8xf32>
    %57 = vector.shape_cast %56 : vector<32x8xf32> to vector<1x32x8xf32>
    %58 = tpu.concatenate %51, %53, %55, %57 in 0 : vector<1x32x8xf32>, vector<1x32x8xf32>, vector<1x32x8xf32>, vector<1x32x8xf32> -> vector<4x32x8xf32>
    %59 = vector.shape_cast %58 : vector<4x32x8xf32> to vector<8x16x8xf32>
    %60 = vector.extract_strided_slice %49 {offsets = [0, 32], sizes = [32, 8], strides = [1, 1]} : vector<32x96xf32> to vector<32x8xf32>
    %61 = vector.shape_cast %60 : vector<32x8xf32> to vector<1x32x8xf32>
    %62 = vector.extract_strided_slice %49 {offsets = [0, 40], sizes = [32, 8], strides = [1, 1]} : vector<32x96xf32> to vector<32x8xf32>
    %63 = vector.shape_cast %62 : vector<32x8xf32> to vector<1x32x8xf32>
    %64 = vector.extract_strided_slice %49 {offsets = [0, 48], sizes = [32, 8], strides = [1, 1]} : vector<32x96xf32> to vector<32x8xf32>
    %65 = vector.shape_cast %64 : vector<32x8xf32> to vector<1x32x8xf32>
    %66 = vector.extract_strided_slice %49 {offsets = [0, 56], sizes = [32, 8], strides = [1, 1]} : vector<32x96xf32> to vector<32x8xf32>
    %67 = vector.shape_cast %66 : vector<32x8xf32> to vector<1x32x8xf32>
    %68 = tpu.concatenate %61, %63, %65, %67 in 0 : vector<1x32x8xf32>, vector<1x32x8xf32>, vector<1x32x8xf32>, vector<1x32x8xf32> -> vector<4x32x8xf32>
    %69 = vector.shape_cast %68 : vector<4x32x8xf32> to vector<8x16x8xf32>
    %70 = vector.extract_strided_slice %49 {offsets = [0, 64], sizes = [32, 8], strides = [1, 1]} : vector<32x96xf32> to vector<32x8xf32>
    %71 = vector.shape_cast %70 : vector<32x8xf32> to vector<1x32x8xf32>
    %72 = vector.extract_strided_slice %49 {offsets = [0, 72], sizes = [32, 8], strides = [1, 1]} : vector<32x96xf32> to vector<32x8xf32>
    %73 = vector.shape_cast %72 : vector<32x8xf32> to vector<1x32x8xf32>
    %74 = vector.extract_strided_slice %49 {offsets = [0, 80], sizes = [32, 8], strides = [1, 1]} : vector<32x96xf32> to vector<32x8xf32>
    %75 = vector.shape_cast %74 : vector<32x8xf32> to vector<1x32x8xf32>
    %76 = vector.extract_strided_slice %49 {offsets = [0, 88], sizes = [32, 8], strides = [1, 1]} : vector<32x96xf32> to vector<32x8xf32>
    %77 = vector.shape_cast %76 : vector<32x8xf32> to vector<1x32x8xf32>
    %78 = tpu.concatenate %71, %73, %75, %77 in 0 : vector<1x32x8xf32>, vector<1x32x8xf32>, vector<1x32x8xf32>, vector<1x32x8xf32> -> vector<4x32x8xf32>
    %79 = vector.shape_cast %78 : vector<4x32x8xf32> to vector<8x16x8xf32>
    "tpu.trace_start"() <{level = 10 : i32, message = "bqd,bkd->bqk"}> : () -> ()
    %cst_23 = arith.constant dense<0.000000e+00> : vector<8x16x16xf32>
    %80 = tpu.matmul %59, %69, %cst_23 {dimension_numbers = #tpu.dot_dimension_numbers<[2], [2], [1], [1], [0, 0, 0, 1, 1, 1], [0], [0]>} : vector<8x16x8xf32>, vector<8x16x8xf32>, vector<8x16x16xf32> -> vector<8x16x16xf32>
    "tpu.trace_stop"() : () -> ()
    %cst_24 = arith.constant dense<0xFF800000> : vector<8x16xf32>
    %81 = vector.multi_reduction <maximumf>, %80, %cst_24 [2] : vector<8x16x16xf32> to vector<8x16xf32>
    %82 = vector.shape_cast %81 : vector<8x16xf32> to vector<8x16x1xf32>
    %83 = vector.broadcast %82 : vector<8x16x1xf32> to vector<8x16x16xf32>
    %84 = arith.subf %80, %83 : vector<8x16x16xf32>
    %85 = math.exp %84 : vector<8x16x16xf32>
    %cst_25 = arith.constant dense<0.000000e+00> : vector<8x16xf32>
    %86 = vector.multi_reduction <add>, %85, %cst_25 [2] : vector<8x16x16xf32> to vector<8x16xf32>
    %87 = vector.shape_cast %86 : vector<8x16xf32> to vector<8x16x1xf32>
    %88 = tpu.reciprocal %87 {approx = true} : vector<8x16x1xf32> -> vector<8x16x1xf32>
    %89 = vector.broadcast %88 : vector<8x16x1xf32> to vector<8x16x16xf32>
    %90 = arith.mulf %85, %89 : vector<8x16x16xf32>
    "tpu.trace_start"() <{level = 10 : i32, message = "bqk,bkd->bqd"}> : () -> ()
    %cst_26 = arith.constant dense<0.000000e+00> : vector<8x16x8xf32>
    %91 = tpu.matmul %90, %79, %cst_26 {dimension_numbers = #tpu.dot_dimension_numbers<[2], [1], [1], [2], [0, 0, 0, 1, 1, 2], [0], [0]>} : vector<8x16x16xf32>, vector<8x16x8xf32>, vector<8x16x8xf32> -> vector<8x16x8xf32>
    "tpu.trace_stop"() : () -> ()
    %92 = vector.shape_cast %91 : vector<8x16x8xf32> to vector<4x32x8xf32>
    %93 = vector.extract_strided_slice %92 {offsets = [0, 0, 0], sizes = [1, 32, 8], strides = [1, 1, 1]} : vector<4x32x8xf32> to vector<1x32x8xf32>
    %94 = vector.shape_cast %93 : vector<1x32x8xf32> to vector<32x8xf32>
    %95 = vector.extract_strided_slice %92 {offsets = [1, 0, 0], sizes = [1, 32, 8], strides = [1, 1, 1]} : vector<4x32x8xf32> to vector<1x32x8xf32>
    %96 = vector.shape_cast %95 : vector<1x32x8xf32> to vector<32x8xf32>
    %97 = vector.extract_strided_slice %92 {offsets = [2, 0, 0], sizes = [1, 32, 8], strides = [1, 1, 1]} : vector<4x32x8xf32> to vector<1x32x8xf32>
    %98 = vector.shape_cast %97 : vector<1x32x8xf32> to vector<32x8xf32>
    %99 = vector.extract_strided_slice %92 {offsets = [3, 0, 0], sizes = [1, 32, 8], strides = [1, 1, 1]} : vector<4x32x8xf32> to vector<1x32x8xf32>
    %100 = vector.shape_cast %99 : vector<1x32x8xf32> to vector<32x8xf32>
    %101 = tpu.concatenate %94, %96, %98, %100 in 1 : vector<32x8xf32>, vector<32x8xf32>, vector<32x8xf32>, vector<32x8xf32> -> vector<32x32xf32>
    %cst_27 = arith.constant dense<0.000000e+00> : vector<32x32xf32>
    %102 = tpu.matmul %101, %16, %cst_27 {dimension_numbers = #tpu.dot_dimension_numbers<[1], [0], [0], [1], [0, 0, 1, 1], [], []>} : vector<32x32xf32>, vector<32x32xf32>, vector<32x32xf32> -> vector<32x32xf32>
    %103 = arith.addf %24, %102 : vector<32x32xf32>
    %104 = vector.broadcast %17 : vector<1x32xf32> to vector<32x32xf32>
    %105 = arith.addf %103, %104 : vector<32x32xf32>
    %cst_28 = arith.constant dense<0.000000e+00> : vector<32xf32>
    %106 = vector.multi_reduction <add>, %105, %cst_28 [1] : vector<32x32xf32> to vector<32xf32>
    %107 = vector.shape_cast %106 : vector<32xf32> to vector<32x1xf32>
    %cst_29 = arith.constant 3.200000e+01 : f32
    %108 = vector.broadcast %cst_29 : f32 to vector<32x1xf32>
    %109 = arith.divf %107, %108 : vector<32x1xf32>
    %110 = vector.broadcast %109 : vector<32x1xf32> to vector<32x32xf32>
    %111 = arith.subf %105, %110 : vector<32x32xf32>
    %112 = arith.mulf %111, %111 : vector<32x32xf32>
    %cst_30 = arith.constant dense<0.000000e+00> : vector<32xf32>
    %113 = vector.multi_reduction <add>, %112, %cst_30 [1] : vector<32x32xf32> to vector<32xf32>
    %114 = vector.shape_cast %113 : vector<32xf32> to vector<32x1xf32>
    %cst_31 = arith.constant 3.200000e+01 : f32
    %115 = vector.broadcast %cst_31 : f32 to vector<32x1xf32>
    %116 = arith.divf %114, %115 : vector<32x1xf32>
    %117 = vector.broadcast %109 : vector<32x1xf32> to vector<32x32xf32>
    %118 = arith.subf %105, %117 : vector<32x32xf32>
    %cst_32 = arith.constant 9.99999974E-6 : f32
    %119 = vector.broadcast %cst_32 : f32 to vector<32x1xf32>
    %120 = arith.addf %116, %119 : vector<32x1xf32>
    %121 = math.rsqrt %120 : vector<32x1xf32>
    %122 = vector.broadcast %121 : vector<32x1xf32> to vector<32x32xf32>
    %123 = arith.mulf %118, %122 : vector<32x32xf32>
    %124 = vector.broadcast %18 : vector<1x32xf32> to vector<32x32xf32>
    %125 = arith.mulf %123, %124 : vector<32x32xf32>
    %126 = vector.broadcast %19 : vector<1x32xf32> to vector<32x32xf32>
    %127 = arith.addf %125, %126 : vector<32x32xf32>
    %cst_33 = arith.constant dense<0.000000e+00> : vector<32x64xf32>
    %128 = tpu.matmul %127, %20, %cst_33 {dimension_numbers = #tpu.dot_dimension_numbers<[1], [0], [0], [1], [0, 0, 1, 1], [], []>} : vector<32x32xf32>, vector<32x64xf32>, vector<32x64xf32> -> vector<32x64xf32>
    %129 = vector.broadcast %21 : vector<1x64xf32> to vector<32x64xf32>
    %130 = arith.addf %128, %129 : vector<32x64xf32>
    %131 = arith.mulf %130, %130 : vector<32x64xf32>
    %132 = arith.mulf %130, %131 : vector<32x64xf32>
    %cst_34 = arith.constant 4.471500e-02 : f32
    %133 = vector.broadcast %cst_34 : f32 to vector<32x64xf32>
    %134 = arith.mulf %133, %132 : vector<32x64xf32>
    %135 = arith.addf %130, %134 : vector<32x64xf32>
    %cst_35 = arith.constant 0.797884583 : f32
    %136 = vector.broadcast %cst_35 : f32 to vector<32x64xf32>
    %137 = arith.mulf %136, %135 : vector<32x64xf32>
    %138 = math.tanh %137 : vector<32x64xf32>
    %cst_36 = arith.constant 1.000000e+00 : f32
    %139 = vector.broadcast %cst_36 : f32 to vector<32x64xf32>
    %140 = arith.addf %139, %138 : vector<32x64xf32>
    %cst_37 = arith.constant 5.000000e-01 : f32
    %141 = vector.broadcast %cst_37 : f32 to vector<32x64xf32>
    %142 = arith.mulf %141, %140 : vector<32x64xf32>
    %143 = arith.mulf %130, %142 : vector<32x64xf32>
    %cst_38 = arith.constant dense<0.000000e+00> : vector<32x32xf32>
    %144 = tpu.matmul %143, %22, %cst_38 {dimension_numbers = #tpu.dot_dimension_numbers<[1], [0], [0], [1], [0, 0, 1, 1], [], []>} : vector<32x64xf32>, vector<64x32xf32>, vector<32x32xf32> -> vector<32x32xf32>
    %145 = arith.addf %105, %144 : vector<32x32xf32>
    %146 = vector.broadcast %23 : vector<1x32xf32> to vector<32x32xf32>
    %147 = arith.addf %145, %146 : vector<32x32xf32>
    %148 = vector.shape_cast %147 : vector<32x32xf32> to vector<2x16x32xf32>
    %cst_39 = arith.constant dense<0.000000e+00> : vector<2x32xf32>
    %149 = vector.multi_reduction <add>, %148, %cst_39 [1] : vector<2x16x32xf32> to vector<2x32xf32>
    %cst_40 = arith.constant 1.600000e+01 : f32
    %150 = vector.broadcast %cst_40 : f32 to vector<2x32xf32>
    %151 = arith.divf %149, %150 : vector<2x32xf32>
    %c0_41 = arith.constant 0 : index
    %c0_42 = arith.constant 0 : index
    %152 = vector.load %arg9[%c0_41, %c0_42] : memref<32x32xf32, #tpu.memory_space<vmem>>, vector<32x32xf32>
    %cst_43 = arith.constant dense<0.000000e+00> : vector<2x32xf32>
    %153 = tpu.matmul %151, %152, %cst_43 {dimension_numbers = #tpu.dot_dimension_numbers<[1], [0], [0], [1], [0, 0, 1, 1], [], []>} : vector<2x32xf32>, vector<32x32xf32>, vector<2x32xf32> -> vector<2x32xf32>
    %154 = vector.extract_strided_slice %0 {offsets = [9, 0], sizes = [1, 32], strides = [1, 1]} : vector<24x128xf32> to vector<1x32xf32>
    %155 = vector.broadcast %154 : vector<1x32xf32> to vector<2x32xf32>
    %156 = arith.addf %153, %155 : vector<2x32xf32>
    %157 = arith.mulf %156, %156 : vector<2x32xf32>
    %cst_44 = arith.constant dense<0.000000e+00> : vector<2xf32>
    %158 = vector.multi_reduction <add>, %157, %cst_44 [1] : vector<2x32xf32> to vector<2xf32>
    %159 = vector.shape_cast %158 : vector<2xf32> to vector<2x1xf32>
    %cst_45 = arith.constant 1.000000e-24 : f32
    %160 = vector.broadcast %cst_45 : f32 to vector<2x1xf32>
    %161 = arith.maximumf %159, %160 : vector<2x1xf32>
    %162 = math.rsqrt %161 : vector<2x1xf32>
    %163 = vector.broadcast %162 : vector<2x1xf32> to vector<2x32xf32>
    %164 = arith.mulf %156, %163 : vector<2x32xf32>
    %c0_46 = arith.constant 0 : index
    %c0_47 = arith.constant 0 : index
    %165 = vector.load %arg16[%c0_46, %c0_47] : memref<2x32xf32, #tpu.memory_space<vmem>>, vector<2x32xf32>
    tpu.vector_store %arg16[%c0_46, %c0_47], %164 {strides = array<i32>} : memref<2x32xf32, #tpu.memory_space<vmem>>, vector<2x32xf32>,
    %c0_48 = arith.constant 0 : index
    %c0_49 = arith.constant 0 : index
    %c0_50 = arith.constant 0 : index
    %166 = vector.load %arg2[%c0_48, %c0_49, %c0_50] : memref<2x8x32xf32, #tpu.memory_space<vmem>>, vector<2x8x32xf32>
    %c0_51 = arith.constant 0 : index
    %c0_52 = arith.constant 0 : index
    %c0_53 = arith.constant 0 : index
    %167 = vector.load %arg3[%c0_51, %c0_52, %c0_53] : memref<2x1x8xf32, #tpu.memory_space<vmem>>, vector<2x1x8xf32>
    %168 = vector.extract_strided_slice %0 {offsets = [10, 0], sizes = [1, 32], strides = [1, 1]} : vector<24x128xf32> to vector<1x32xf32>
    %169 = vector.extract_strided_slice %0 {offsets = [11, 0], sizes = [1, 32], strides = [1, 1]} : vector<24x128xf32> to vector<1x32xf32>
    %c0_54 = arith.constant 0 : index
    %c0_55 = arith.constant 0 : index
    %170 = vector.load %arg10[%c0_54, %c0_55] : memref<32x96xf32, #tpu.memory_space<vmem>>, vector<32x96xf32>
    %171 = vector.extract_strided_slice %0 {offsets = [12, 0], sizes = [1, 96], strides = [1, 1]} : vector<24x128xf32> to vector<1x96xf32>
    %c0_56 = arith.constant 0 : index
    %c0_57 = arith.constant 0 : index
    %172 = vector.load %arg11[%c0_56, %c0_57] : memref<32x32xf32, #tpu.memory_space<vmem>>, vector<32x32xf32>
    %173 = vector.extract_strided_slice %0 {offsets = [13, 0], sizes = [1, 32], strides = [1, 1]} : vector<24x128xf32> to vector<1x32xf32>
    %174 = vector.extract_strided_slice %0 {offsets = [14, 0], sizes = [1, 32], strides = [1, 1]} : vector<24x128xf32> to vector<1x32xf32>
    %175 = vector.extract_strided_slice %0 {offsets = [15, 0], sizes = [1, 32], strides = [1, 1]} : vector<24x128xf32> to vector<1x32xf32>
    %c0_58 = arith.constant 0 : index
    %c0_59 = arith.constant 0 : index
    %176 = vector.load %arg12[%c0_58, %c0_59] : memref<32x64xf32, #tpu.memory_space<vmem>>, vector<32x64xf32>
    %177 = vector.extract_strided_slice %0 {offsets = [16, 0], sizes = [1, 64], strides = [1, 1]} : vector<24x128xf32> to vector<1x64xf32>
    %c0_60 = arith.constant 0 : index
    %c0_61 = arith.constant 0 : index
    %178 = vector.load %arg13[%c0_60, %c0_61] : memref<64x32xf32, #tpu.memory_space<vmem>>, vector<64x32xf32>
    %179 = vector.extract_strided_slice %0 {offsets = [17, 0], sizes = [1, 32], strides = [1, 1]} : vector<24x128xf32> to vector<1x32xf32>
    %180 = vector.shape_cast %166 : vector<2x8x32xf32> to vector<16x32xf32>
    %cst_62 = arith.constant dense<0.000000e+00> : vector<16xf32>
    %181 = vector.multi_reduction <add>, %180, %cst_62 [1] : vector<16x32xf32> to vector<16xf32>
    %182 = vector.shape_cast %181 : vector<16xf32> to vector<16x1xf32>
    %cst_63 = arith.constant 3.200000e+01 : f32
    %183 = vector.broadcast %cst_63 : f32 to vector<16x1xf32>
    %184 = arith.divf %182, %183 : vector<16x1xf32>
    %185 = vector.broadcast %184 : vector<16x1xf32> to vector<16x32xf32>
    %186 = arith.subf %180, %185 : vector<16x32xf32>
    %187 = arith.mulf %186, %186 : vector<16x32xf32>
    %cst_64 = arith.constant dense<0.000000e+00> : vector<16xf32>
    %188 = vector.multi_reduction <add>, %187, %cst_64 [1] : vector<16x32xf32> to vector<16xf32>
    %189 = vector.shape_cast %188 : vector<16xf32> to vector<16x1xf32>
    %cst_65 = arith.constant 3.200000e+01 : f32
    %190 = vector.broadcast %cst_65 : f32 to vector<16x1xf32>
    %191 = arith.divf %189, %190 : vector<16x1xf32>
    %192 = vector.broadcast %184 : vector<16x1xf32> to vector<16x32xf32>
    %193 = arith.subf %180, %192 : vector<16x32xf32>
    %cst_66 = arith.constant 9.99999974E-6 : f32
    %194 = vector.broadcast %cst_66 : f32 to vector<16x1xf32>
    %195 = arith.addf %191, %194 : vector<16x1xf32>
    %196 = math.rsqrt %195 : vector<16x1xf32>
    %197 = vector.broadcast %196 : vector<16x1xf32> to vector<16x32xf32>
    %198 = arith.mulf %193, %197 : vector<16x32xf32>
    %199 = vector.broadcast %168 : vector<1x32xf32> to vector<16x32xf32>
    %200 = arith.mulf %198, %199 : vector<16x32xf32>
    %201 = vector.broadcast %169 : vector<1x32xf32> to vector<16x32xf32>
    %202 = arith.addf %200, %201 : vector<16x32xf32>
    %cst_67 = arith.constant dense<0.000000e+00> : vector<16x96xf32>
    %203 = tpu.matmul %202, %170, %cst_67 {dimension_numbers = #tpu.dot_dimension_numbers<[1], [0], [0], [1], [0, 0, 1, 1], [], []>} : vector<16x32xf32>, vector<32x96xf32>, vector<16x96xf32> -> vector<16x96xf32>
    %204 = vector.broadcast %171 : vector<1x96xf32> to vector<16x96xf32>
    %205 = arith.addf %203, %204 : vector<16x96xf32>
    %206 = vector.extract_strided_slice %205 {offsets = [0, 0], sizes = [16, 8], strides = [1, 1]} : vector<16x96xf32> to vector<16x8xf32>
    %207 = vector.shape_cast %206 : vector<16x8xf32> to vector<1x16x8xf32>
    %208 = vector.extract_strided_slice %205 {offsets = [0, 8], sizes = [16, 8], strides = [1, 1]} : vector<16x96xf32> to vector<16x8xf32>
    %209 = vector.shape_cast %208 : vector<16x8xf32> to vector<1x16x8xf32>
    %210 = vector.extract_strided_slice %205 {offsets = [0, 16], sizes = [16, 8], strides = [1, 1]} : vector<16x96xf32> to vector<16x8xf32>
    %211 = vector.shape_cast %210 : vector<16x8xf32> to vector<1x16x8xf32>
    %212 = vector.extract_strided_slice %205 {offsets = [0, 24], sizes = [16, 8], strides = [1, 1]} : vector<16x96xf32> to vector<16x8xf32>
    %213 = vector.shape_cast %212 : vector<16x8xf32> to vector<1x16x8xf32>
    %214 = tpu.concatenate %207, %209, %211, %213 in 0 : vector<1x16x8xf32>, vector<1x16x8xf32>, vector<1x16x8xf32>, vector<1x16x8xf32> -> vector<4x16x8xf32>
    %215 = vector.shape_cast %214 : vector<4x16x8xf32> to vector<8x8x8xf32>
    %216 = vector.extract_strided_slice %205 {offsets = [0, 32], sizes = [16, 8], strides = [1, 1]} : vector<16x96xf32> to vector<16x8xf32>
    %217 = vector.shape_cast %216 : vector<16x8xf32> to vector<1x16x8xf32>
    %218 = vector.extract_strided_slice %205 {offsets = [0, 40], sizes = [16, 8], strides = [1, 1]} : vector<16x96xf32> to vector<16x8xf32>
    %219 = vector.shape_cast %218 : vector<16x8xf32> to vector<1x16x8xf32>
    %220 = vector.extract_strided_slice %205 {offsets = [0, 48], sizes = [16, 8], strides = [1, 1]} : vector<16x96xf32> to vector<16x8xf32>
    %221 = vector.shape_cast %220 : vector<16x8xf32> to vector<1x16x8xf32>
    %222 = vector.extract_strided_slice %205 {offsets = [0, 56], sizes = [16, 8], strides = [1, 1]} : vector<16x96xf32> to vector<16x8xf32>
    %223 = vector.shape_cast %222 : vector<16x8xf32> to vector<1x16x8xf32>
    %224 = tpu.concatenate %217, %219, %221, %223 in 0 : vector<1x16x8xf32>, vector<1x16x8xf32>, vector<1x16x8xf32>, vector<1x16x8xf32> -> vector<4x16x8xf32>
    %225 = vector.shape_cast %224 : vector<4x16x8xf32> to vector<8x8x8xf32>
    %226 = vector.extract_strided_slice %205 {offsets = [0, 64], sizes = [16, 8], strides = [1, 1]} : vector<16x96xf32> to vector<16x8xf32>
    %227 = vector.shape_cast %226 : vector<16x8xf32> to vector<1x16x8xf32>
    %228 = vector.extract_strided_slice %205 {offsets = [0, 72], sizes = [16, 8], strides = [1, 1]} : vector<16x96xf32> to vector<16x8xf32>
    %229 = vector.shape_cast %228 : vector<16x8xf32> to vector<1x16x8xf32>
    %230 = vector.extract_strided_slice %205 {offsets = [0, 80], sizes = [16, 8], strides = [1, 1]} : vector<16x96xf32> to vector<16x8xf32>
    %231 = vector.shape_cast %230 : vector<16x8xf32> to vector<1x16x8xf32>
    %232 = vector.extract_strided_slice %205 {offsets = [0, 88], sizes = [16, 8], strides = [1, 1]} : vector<16x96xf32> to vector<16x8xf32>
    %233 = vector.shape_cast %232 : vector<16x8xf32> to vector<1x16x8xf32>
    %234 = tpu.concatenate %227, %229, %231, %233 in 0 : vector<1x16x8xf32>, vector<1x16x8xf32>, vector<1x16x8xf32>, vector<1x16x8xf32> -> vector<4x16x8xf32>
    %235 = vector.shape_cast %234 : vector<4x16x8xf32> to vector<8x8x8xf32>
    "tpu.trace_start"() <{level = 10 : i32, message = "bqd,bkd->bqk"}> : () -> ()
    %cst_68 = arith.constant dense<0.000000e+00> : vector<8x8x8xf32>
    %236 = tpu.matmul %215, %225, %cst_68 {dimension_numbers = #tpu.dot_dimension_numbers<[2], [2], [1], [1], [0, 0, 0, 1, 1, 1], [0], [0]>} : vector<8x8x8xf32>, vector<8x8x8xf32>, vector<8x8x8xf32> -> vector<8x8x8xf32>
    "tpu.trace_stop"() : () -> ()
    %237 = tpu.concatenate %167, %167, %167, %167 in 0 : vector<2x1x8xf32>, vector<2x1x8xf32>, vector<2x1x8xf32>, vector<2x1x8xf32> -> vector<8x1x8xf32>
    %238 = vector.broadcast %237 : vector<8x1x8xf32> to vector<8x8x8xf32>
    %239 = arith.addf %236, %238 : vector<8x8x8xf32>
    %cst_69 = arith.constant dense<0xFF800000> : vector<8x8xf32>
    %240 = vector.multi_reduction <maximumf>, %239, %cst_69 [2] : vector<8x8x8xf32> to vector<8x8xf32>
    %241 = vector.shape_cast %240 : vector<8x8xf32> to vector<8x8x1xf32>
    %242 = vector.broadcast %241 : vector<8x8x1xf32> to vector<8x8x8xf32>
    %243 = arith.subf %239, %242 : vector<8x8x8xf32>
    %244 = math.exp %243 : vector<8x8x8xf32>
    %cst_70 = arith.constant dense<0.000000e+00> : vector<8x8xf32>
    %245 = vector.multi_reduction <add>, %244, %cst_70 [2] : vector<8x8x8xf32> to vector<8x8xf32>
    %246 = vector.shape_cast %245 : vector<8x8xf32> to vector<8x8x1xf32>
    %247 = tpu.reciprocal %246 {approx = true} : vector<8x8x1xf32> -> vector<8x8x1xf32>
    %248 = vector.broadcast %247 : vector<8x8x1xf32> to vector<8x8x8xf32>
    %249 = arith.mulf %244, %248 : vector<8x8x8xf32>
    "tpu.trace_start"() <{level = 10 : i32, message = "bqk,bkd->bqd"}> : () -> ()
    %cst_71 = arith.constant dense<0.000000e+00> : vector<8x8x8xf32>
    %250 = tpu.matmul %249, %235, %cst_71 {dimension_numbers = #tpu.dot_dimension_numbers<[2], [1], [1], [2], [0, 0, 0, 1, 1, 2], [0], [0]>} : vector<8x8x8xf32>, vector<8x8x8xf32>, vector<8x8x8xf32> -> vector<8x8x8xf32>
    "tpu.trace_stop"() : () -> ()
    %251 = vector.shape_cast %250 : vector<8x8x8xf32> to vector<4x16x8xf32>
    %252 = vector.extract_strided_slice %251 {offsets = [0, 0, 0], sizes = [1, 16, 8], strides = [1, 1, 1]} : vector<4x16x8xf32> to vector<1x16x8xf32>
    %253 = vector.shape_cast %252 : vector<1x16x8xf32> to vector<16x8xf32>
    %254 = vector.extract_strided_slice %251 {offsets = [1, 0, 0], sizes = [1, 16, 8], strides = [1, 1, 1]} : vector<4x16x8xf32> to vector<1x16x8xf32>
    %255 = vector.shape_cast %254 : vector<1x16x8xf32> to vector<16x8xf32>
    %256 = vector.extract_strided_slice %251 {offsets = [2, 0, 0], sizes = [1, 16, 8], strides = [1, 1, 1]} : vector<4x16x8xf32> to vector<1x16x8xf32>
    %257 = vector.shape_cast %256 : vector<1x16x8xf32> to vector<16x8xf32>
    %258 = vector.extract_strided_slice %251 {offsets = [3, 0, 0], sizes = [1, 16, 8], strides = [1, 1, 1]} : vector<4x16x8xf32> to vector<1x16x8xf32>
    %259 = vector.shape_cast %258 : vector<1x16x8xf32> to vector<16x8xf32>
    %260 = tpu.concatenate %253, %255, %257, %259 in 1 : vector<16x8xf32>, vector<16x8xf32>, vector<16x8xf32>, vector<16x8xf32> -> vector<16x32xf32>
    %cst_72 = arith.constant dense<0.000000e+00> : vector<16x32xf32>
    %261 = tpu.matmul %260, %172, %cst_72 {dimension_numbers = #tpu.dot_dimension_numbers<[1], [0], [0], [1], [0, 0, 1, 1], [], []>} : vector<16x32xf32>, vector<32x32xf32>, vector<16x32xf32> -> vector<16x32xf32>
    %262 = arith.addf %180, %261 : vector<16x32xf32>
    %263 = vector.broadcast %173 : vector<1x32xf32> to vector<16x32xf32>
    %264 = arith.addf %262, %263 : vector<16x32xf32>
    %cst_73 = arith.constant dense<0.000000e+00> : vector<16xf32>
    %265 = vector.multi_reduction <add>, %264, %cst_73 [1] : vector<16x32xf32> to vector<16xf32>
    %266 = vector.shape_cast %265 : vector<16xf32> to vector<16x1xf32>
    %cst_74 = arith.constant 3.200000e+01 : f32
    %267 = vector.broadcast %cst_74 : f32 to vector<16x1xf32>
    %268 = arith.divf %266, %267 : vector<16x1xf32>
    %269 = vector.broadcast %268 : vector<16x1xf32> to vector<16x32xf32>
    %270 = arith.subf %264, %269 : vector<16x32xf32>
    %271 = arith.mulf %270, %270 : vector<16x32xf32>
    %cst_75 = arith.constant dense<0.000000e+00> : vector<16xf32>
    %272 = vector.multi_reduction <add>, %271, %cst_75 [1] : vector<16x32xf32> to vector<16xf32>
    %273 = vector.shape_cast %272 : vector<16xf32> to vector<16x1xf32>
    %cst_76 = arith.constant 3.200000e+01 : f32
    %274 = vector.broadcast %cst_76 : f32 to vector<16x1xf32>
    %275 = arith.divf %273, %274 : vector<16x1xf32>
    %276 = vector.broadcast %268 : vector<16x1xf32> to vector<16x32xf32>
    %277 = arith.subf %264, %276 : vector<16x32xf32>
    %cst_77 = arith.constant 9.99999974E-6 : f32
    %278 = vector.broadcast %cst_77 : f32 to vector<16x1xf32>
    %279 = arith.addf %275, %278 : vector<16x1xf32>
    %280 = math.rsqrt %279 : vector<16x1xf32>
    %281 = vector.broadcast %280 : vector<16x1xf32> to vector<16x32xf32>
    %282 = arith.mulf %277, %281 : vector<16x32xf32>
    %283 = vector.broadcast %174 : vector<1x32xf32> to vector<16x32xf32>
    %284 = arith.mulf %282, %283 : vector<16x32xf32>
    %285 = vector.broadcast %175 : vector<1x32xf32> to vector<16x32xf32>
    %286 = arith.addf %284, %285 : vector<16x32xf32>
    %cst_78 = arith.constant dense<0.000000e+00> : vector<16x64xf32>
    %287 = tpu.matmul %286, %176, %cst_78 {dimension_numbers = #tpu.dot_dimension_numbers<[1], [0], [0], [1], [0, 0, 1, 1], [], []>} : vector<16x32xf32>, vector<32x64xf32>, vector<16x64xf32> -> vector<16x64xf32>
    %288 = vector.broadcast %177 : vector<1x64xf32> to vector<16x64xf32>
    %289 = arith.addf %287, %288 : vector<16x64xf32>
    %290 = arith.mulf %289, %289 : vector<16x64xf32>
    %291 = arith.mulf %289, %290 : vector<16x64xf32>
    %cst_79 = arith.constant 4.471500e-02 : f32
    %292 = vector.broadcast %cst_79 : f32 to vector<16x64xf32>
    %293 = arith.mulf %292, %291 : vector<16x64xf32>
    %294 = arith.addf %289, %293 : vector<16x64xf32>
    %cst_80 = arith.constant 0.797884583 : f32
    %295 = vector.broadcast %cst_80 : f32 to vector<16x64xf32>
    %296 = arith.mulf %295, %294 : vector<16x64xf32>
    %297 = math.tanh %296 : vector<16x64xf32>
    %cst_81 = arith.constant 1.000000e+00 : f32
    %298 = vector.broadcast %cst_81 : f32 to vector<16x64xf32>
    %299 = arith.addf %298, %297 : vector<16x64xf32>
    %cst_82 = arith.constant 5.000000e-01 : f32
    %300 = vector.broadcast %cst_82 : f32 to vector<16x64xf32>
    %301 = arith.mulf %300, %299 : vector<16x64xf32>
    %302 = arith.mulf %289, %301 : vector<16x64xf32>
    %cst_83 = arith.constant dense<0.000000e+00> : vector<16x32xf32>
    %303 = tpu.matmul %302, %178, %cst_83 {dimension_numbers = #tpu.dot_dimension_numbers<[1], [0], [0], [1], [0, 0, 1, 1], [], []>} : vector<16x64xf32>, vector<64x32xf32>, vector<16x32xf32> -> vector<16x32xf32>
    %304 = arith.addf %264, %303 : vector<16x32xf32>
    %305 = vector.broadcast %179 : vector<1x32xf32> to vector<16x32xf32>
    %306 = arith.addf %304, %305 : vector<16x32xf32>
    %307 = vector.shape_cast %306 : vector<16x32xf32> to vector<2x8x32xf32>
    %308 = vector.extract_strided_slice %307 {offsets = [0, 0, 0], sizes = [2, 1, 32], strides = [1, 1, 1]} : vector<2x8x32xf32> to vector<2x1x32xf32>
    %309 = vector.shape_cast %308 : vector<2x1x32xf32> to vector<2x32xf32>
    %c0_84 = arith.constant 0 : index
    %c0_85 = arith.constant 0 : index
    %310 = vector.load %arg14[%c0_84, %c0_85] : memref<32x32xf32, #tpu.memory_space<vmem>>, vector<32x32xf32>
    %cst_86 = arith.constant dense<0.000000e+00> : vector<2x32xf32>
    %311 = tpu.matmul %309, %310, %cst_86 {dimension_numbers = #tpu.dot_dimension_numbers<[1], [0], [0], [1], [0, 0, 1, 1], [], []>} : vector<2x32xf32>, vector<32x32xf32>, vector<2x32xf32> -> vector<2x32xf32>
    %312 = arith.mulf %311, %311 : vector<2x32xf32>
    %cst_87 = arith.constant dense<0.000000e+00> : vector<2xf32>
    %313 = vector.multi_reduction <add>, %312, %cst_87 [1] : vector<2x32xf32> to vector<2xf32>
    %314 = vector.shape_cast %313 : vector<2xf32> to vector<2x1xf32>
    %cst_88 = arith.constant 1.000000e-24 : f32
    %315 = vector.broadcast %cst_88 : f32 to vector<2x1xf32>
    %316 = arith.maximumf %314, %315 : vector<2x1xf32>
    %317 = math.rsqrt %316 : vector<2x1xf32>
    %318 = vector.broadcast %317 : vector<2x1xf32> to vector<2x32xf32>
    %319 = arith.mulf %311, %318 : vector<2x32xf32>
    %c0_89 = arith.constant 0 : index
    %c0_90 = arith.constant 0 : index
    %320 = vector.load %arg17[%c0_89, %c0_90] : memref<2x32xf32, #tpu.memory_space<vmem>>, vector<2x32xf32>
    tpu.vector_store %arg17[%c0_89, %c0_90], %319 {strides = array<i32>} : memref<2x32xf32, #tpu.memory_space<vmem>>, vector<2x32xf32>,
    return
  }
}

</mosaic_0001>

<llo_original>
// kernel: clip_forward.1
$region0: #{clip_forward.1}
  #allocation0 [shape = 'u32[]', space=smem, size = 0x4, offset = 0x4, fixed_abs, tag = 'smem constant byte address 0x4 - core index']
  #allocation1 [shape = 'u32[72,128]{1,0:T(1,128)}', space=vmem, size = 0x9000, scoped, tag = 'internal scratch']
  %s0 = inlined_call_operand.vmem [shape: f32[2,16,48], index: 0, kind: input, shape index: {}]
  %s1 = inlined_call_operand.vmem [shape: f32[1,16,32], index: 1, kind: input, shape index: {}]
  %s2 = inlined_call_operand.vmem [shape: f32[2,8,32], index: 2, kind: input, shape index: {}]
  %s3 = inlined_call_operand.vmem [shape: f32[2,1,8], index: 3, kind: input, shape index: {}]
  %s4 = inlined_call_operand.vmem [shape: f32[48,32], index: 4, kind: input, shape index: {}]
  %s5 = inlined_call_operand.vmem [shape: f32[32,96], index: 5, kind: input, shape index: {}]
  %s6 = inlined_call_operand.vmem [shape: f32[32,32], index: 6, kind: input, shape index: {}]
  %s7 = inlined_call_operand.vmem [shape: f32[32,64], index: 7, kind: input, shape index: {}]
  %s8 = inlined_call_operand.vmem [shape: f32[64,32], index: 8, kind: input, shape index: {}]
  %s9 = inlined_call_operand.vmem [shape: f32[32,32], index: 9, kind: input, shape index: {}]
  %s10 = inlined_call_operand.vmem [shape: f32[32,96], index: 10, kind: input, shape index: {}]
  %s11 = inlined_call_operand.vmem [shape: f32[32,32], index: 11, kind: input, shape index: {}]
  %s12 = inlined_call_operand.vmem [shape: f32[32,64], index: 12, kind: input, shape index: {}]
  %s13 = inlined_call_operand.vmem [shape: f32[64,32], index: 13, kind: input, shape index: {}]
  %s14 = inlined_call_operand.vmem [shape: f32[32,32], index: 14, kind: input, shape index: {}]
  %s15 = inlined_call_operand.vmem [shape: f32[24,128], index: 15, kind: input, shape index: {}]
  %s16 = inlined_call_operand.hbm [shape: f32[2,32], index: 16, kind: output, shape index: {0}]
  %s17 = inlined_call_operand.hbm [shape: f32[2,32], index: 17, kind: output, shape index: {1}]
  %18 = xla_tuple %s16, %s17
  %s19 = sld [smem:[#allocation0]]
  $region82: #{clip_forward.1} parent=0
    _
  %s21 = ssub.s32 1, %s19
  %s22 = scalar_select 0, %s21, %s19
  $region1: #{clip_forward.1} parent=0
    #allocation2 [shape = 'u8[1024]{0}', space=vmem, size = 0x400, scoped, tag = 'output window, operand 0, single buffered']
    #allocation3 [shape = 's32[1]{0}', space=sflag, size = 0x4, scoped, tag = 'scoped memory for clip_forward.1']
    #allocation4 [shape = 'u8[1024]{0}', space=vmem, size = 0x400, scoped, tag = 'output window, operand 1, single buffered']
    #allocation5 [shape = 's32[1]{0}', space=sflag, size = 0x4, scoped, tag = 'scoped memory for clip_forward.1']
    %23 = vsyncpa [#allocation3], 0
    %24 = vsyncpa [#allocation5], 0
    // Predicated region
    $region2: #{clip_forward.1} parent=1 // pred_check
      _
    $region3: #{clip_forward.1} parent=1 // pred_check_branch
      %26 = sbr.rel (0) target = $region5
    $region4: #{clip_forward.1} parent=1 // pred_region
      _
    $region5: #{clip_forward.1} parent=1 // pred_fallthru
      _
    // Predicated region
    $region6: #{clip_forward.1} parent=1 // pred_check
      _
    $region7: #{clip_forward.1} parent=1 // pred_check_branch
      %28 = sbr.rel (0) target = $region9
    $region8: #{clip_forward.1} parent=1 // pred_region
      _
    $region9: #{clip_forward.1} parent=1 // pred_fallthru
      _
    // Predicated region
    $region10: #{clip_forward.1} parent=1 // pred_check
      _
    $region11: #{clip_forward.1} parent=1 // pred_check_branch
      %30 = sbr.rel (0) target = $region13
    $region12: #{clip_forward.1} parent=1 // pred_region
      _
    $region13: #{clip_forward.1} parent=1 // pred_fallthru
      _
    // Predicated region
    $region14: #{clip_forward.1} parent=1 // pred_check
      _
    $region15: #{clip_forward.1} parent=1 // pred_check_branch
      %32 = sbr.rel (0) target = $region17
    $region16: #{clip_forward.1} parent=1 // pred_region
      _
    $region17: #{clip_forward.1} parent=1 // pred_fallthru
      _
    // Predicated region
    $region18: #{clip_forward.1} parent=1 // pred_check
      _
    $region19: #{clip_forward.1} parent=1 // pred_check_branch
      %34 = sbr.rel (0) target = $region21
    $region20: #{clip_forward.1} parent=1 // pred_region
      _
    $region21: #{clip_forward.1} parent=1 // pred_fallthru
      _
    // Predicated region
    $region22: #{clip_forward.1} parent=1 // pred_check
      _
    $region23: #{clip_forward.1} parent=1 // pred_check_branch
      %36 = sbr.rel (0) target = $region25
    $region24: #{clip_forward.1} parent=1 // pred_region
      _
    $region25: #{clip_forward.1} parent=1 // pred_fallthru
      _
    // Predicated region
    $region26: #{clip_forward.1} parent=1 // pred_check
      _
    $region27: #{clip_forward.1} parent=1 // pred_check_branch
      %38 = sbr.rel (0) target = $region29
    $region28: #{clip_forward.1} parent=1 // pred_region
      _
    $region29: #{clip_forward.1} parent=1 // pred_fallthru
      _
    // Predicated region
    $region30: #{clip_forward.1} parent=1 // pred_check
      _
    $region31: #{clip_forward.1} parent=1 // pred_check_branch
      %40 = sbr.rel (0) target = $region33
    $region32: #{clip_forward.1} parent=1 // pred_region
      _
    $region33: #{clip_forward.1} parent=1 // pred_fallthru
      _
    // Predicated region
    $region34: #{clip_forward.1} parent=1 // pred_check
      _
    $region35: #{clip_forward.1} parent=1 // pred_check_branch
      %42 = sbr.rel (0) target = $region37
    $region36: #{clip_forward.1} parent=1 // pred_region
      _
    $region37: #{clip_forward.1} parent=1 // pred_fallthru
      _
    // Predicated region
    $region38: #{clip_forward.1} parent=1 // pred_check
      _
    $region39: #{clip_forward.1} parent=1 // pred_check_branch
      %44 = sbr.rel (0) target = $region41
    $region40: #{clip_forward.1} parent=1 // pred_region
      _
    $region41: #{clip_forward.1} parent=1 // pred_fallthru
      _
    // Predicated region
    $region42: #{clip_forward.1} parent=1 // pred_check
      _
    $region43: #{clip_forward.1} parent=1 // pred_check_branch
      %46 = sbr.rel (0) target = $region45
    $region44: #{clip_forward.1} parent=1 // pred_region
      _
    $region45: #{clip_forward.1} parent=1 // pred_fallthru
      _
    // Predicated region
    $region46: #{clip_forward.1} parent=1 // pred_check
      _
    $region47: #{clip_forward.1} parent=1 // pred_check_branch
      %48 = sbr.rel (0) target = $region49
    $region48: #{clip_forward.1} parent=1 // pred_region
      _
    $region49: #{clip_forward.1} parent=1 // pred_fallthru
      _
    // Predicated region
    $region50: #{clip_forward.1} parent=1 // pred_check
      _
    $region51: #{clip_forward.1} parent=1 // pred_check_branch
      %50 = sbr.rel (0) target = $region53
    $region52: #{clip_forward.1} parent=1 // pred_region
      _
    $region53: #{clip_forward.1} parent=1 // pred_fallthru
      _
    // Predicated region
    $region54: #{clip_forward.1} parent=1 // pred_check
      _
    $region55: #{clip_forward.1} parent=1 // pred_check_branch
      %52 = sbr.rel (0) target = $region57
    $region56: #{clip_forward.1} parent=1 // pred_region
      _
    $region57: #{clip_forward.1} parent=1 // pred_fallthru
      _
    // Predicated region
    $region58: #{clip_forward.1} parent=1 // pred_check
      _
    $region59: #{clip_forward.1} parent=1 // pred_check_branch
      %54 = sbr.rel (0) target = $region61
    $region60: #{clip_forward.1} parent=1 // pred_region
      _
    $region61: #{clip_forward.1} parent=1 // pred_fallthru
      _
    // Predicated region
    $region62: #{clip_forward.1} parent=1 // pred_check
      _
    $region63: #{clip_forward.1} parent=1 // pred_check_branch
      %56 = sbr.rel (0) target = $region65
    $region64: #{clip_forward.1} parent=1 // pred_region
      _
    $region65: #{clip_forward.1} parent=1 // pred_fallthru
      _
    %v57 = vld [vmem:[%s15] sm:$0xff]
    %v58 = vld [vmem:[%s15 + $0x8] sm:$0xff]
    %v59 = vld [vmem:[%s15 + $0x10] sm:$0xff]
    %v60 = vld [vmem:[%s0] sm:$0xff]
    %v61 = vld [vmem:[%s0 + $0x8] sm:$0xff]
    %v62 = vld [vmem:[%s0 + $0x10] sm:$0xff]
    %v63 = vld [vmem:[%s0 + $0x18] sm:$0xff]
    %v64 = vld [vmem:[%s4] sm:$0xff]
    %v65 = vld [vmem:[%s4 + $0x8] sm:$0xff]
    %v66 = vld [vmem:[%s4 + $0x10] sm:$0xff]
    %v67 = vld [vmem:[%s4 + $0x18] sm:$0xff]
    %v68 = vld [vmem:[%s4 + $0x20] sm:$0xff]
    %v69 = vld [vmem:[%s4 + $0x28] sm:$0xff]
    %v70 = vperm.slane %v57, 0
    %vm71 = vcmask 392192
    %v73 = vsel %vm71, %v60, 0
    %v76 = vsel %vm71, %v61, 0
    %v79 = vsel %vm71, %v62, 0
    %v82 = vsel %vm71, %v63, 0
    %84 = vmatpush.msra.mxu0 0.0
    %85 = vmatpush.msra.mxu0 0.0
    %86 = vmatpush.msra.mxu0 0.0
    %87 = vmatpush.msra.mxu0 0.0
    %88 = vmatpush.msra.mxu0 0.0
    %89 = vmatpush.msra.mxu0 0.0
    %90 = vmatpush.msra.mxu0 0.0
    %91 = vmatpush.msra.mxu0 0.0
    %92 = vmatpush.msra.mxu0 0.0
    %93 = vmatpush.msra.mxu0 0.0
    %94 = vmatpush.msra.mxu0 %v69
    %95 = vmatpush.msra.mxu0 %v68
    %96 = vmatpush.msra.mxu0 %v67
    %97 = vmatpush.msra.mxu0 %v66
    %98 = vmatpush.msra.mxu0 %v65
    %99 = vmatpush.msra.mxu0 %v64
    %100 = vmatmul.f32.gmra.mxu0 %v73
    %v101 = vpop.f32.mrf.mxu0
    %v102 = vadd.f32 %v70, %v101
    %103 = vmatmul.f32.gmra.mxu0 %v76
    %v104 = vpop.f32.mrf.mxu0
    %v105 = vadd.f32 %v70, %v104
    %106 = vmatmul.f32.gmra.mxu0 %v79
    %v107 = vpop.f32.mrf.mxu0
    %v108 = vadd.f32 %v70, %v107
    %109 = vmatmul.f32.gmra.mxu0 %v82
    %v110 = vpop.f32.mrf.mxu0
    %v111 = vadd.f32 %v70, %v110
    %112 = vdwg.mxu0
    %v113 = vld [vmem:[%s1] sm:$0xff]
    %v114 = vld [vmem:[%s1 + $0x8] sm:$0xff]
    %v115 = vadd.f32 %v102, %v113
    %v116 = vadd.f32 %v105, %v114
    %v117 = vadd.f32 %v108, %v113
    %v118 = vadd.f32 %v111, %v114
    %v119 = vld [vmem:[%s5] sm:$0xff]
    %v120 = vld [vmem:[%s5 + $0x8] sm:$0xff]
    %v121 = vld [vmem:[%s5 + $0x10] sm:$0xff]
    %v122 = vld [vmem:[%s5 + $0x18] sm:$0xff]
    %v123 = vld [vmem:[%s6] sm:$0xff]
    %v124 = vld [vmem:[%s6 + $0x8] sm:$0xff]
    %v125 = vld [vmem:[%s6 + $0x10] sm:$0xff]
    %v126 = vld [vmem:[%s6 + $0x18] sm:$0xff]
    %v127 = vld [vmem:[%s7] sm:$0xff]
    %v128 = vld [vmem:[%s7 + $0x8] sm:$0xff]
    %v129 = vld [vmem:[%s7 + $0x10] sm:$0xff]
    %v130 = vld [vmem:[%s7 + $0x18] sm:$0xff]
    %v131 = vld [vmem:[%s8] sm:$0xff]
    %v132 = vld [vmem:[%s8 + $0x8] sm:$0xff]
    %v133 = vld [vmem:[%s8 + $0x10] sm:$0xff]
    %v134 = vld [vmem:[%s8 + $0x18] sm:$0xff]
    %v135 = vld [vmem:[%s8 + $0x20] sm:$0xff]
    %v136 = vld [vmem:[%s8 + $0x28] sm:$0xff]
    %v137 = vld [vmem:[%s8 + $0x30] sm:$0xff]
    %v138 = vld [vmem:[%s8 + $0x38] sm:$0xff]
    %vm139 = vcmask 261120
    %v140 = vsel %vm139, %v115, 0.0
    %141 = vadd.xlane.f32.xlu0 %v140
    %v142 = vpop.xlane.xlu0 %141
    %v143 = vsel %vm139, %v116, 0.0
    %144 = vadd.xlane.f32.xlu0 %v143
    %v145 = vpop.xlane.xlu0 %144
    %v146 = vsel %vm139, %v117, 0.0
    %147 = vadd.xlane.f32.xlu0 %v146
    %v148 = vpop.xlane.xlu0 %147
    %v149 = vsel %vm139, %v118, 0.0
    %150 = vadd.xlane.f32.xlu0 %v149
    %v151 = vpop.xlane.xlu0 %150
    %v152 = vrcp.pop 32.0
    %v153 = vmul.f32 32.0, %v152
    %v154 = vsub.f32 1.0, %v153
    %v155 = vmul.f32 %v152, %v154
    %v156 = vadd.f32 %v152, %v155
    %vm157 = vweird.f32 %v152
    %v158 = vsel %vm157, %v152, %v156
    %v159 = vmul.f32 %v142, %v158
    %v160 = vmul.f32 %v145, %v158
    %v161 = vmul.f32 %v148, %v158
    %v162 = vmul.f32 %v151, %v158
    %v163 = vsub.f32 %v115, %v159
    %v164 = vsub.f32 %v116, %v160
    %v165 = vsub.f32 %v117, %v161
    %v166 = vsub.f32 %v118, %v162
    %v167 = vmul.f32 %v163, %v163
    %v168 = vmul.f32 %v164, %v164
    %v169 = vmul.f32 %v165, %v165
    %v170 = vmul.f32 %v166, %v166
    %v171 = vsel %vm139, %v167, 0.0
    %172 = vadd.xlane.f32.xlu0 %v171
    %v173 = vpop.xlane.xlu0 %172
    %v174 = vsel %vm139, %v168, 0.0
    %175 = vadd.xlane.f32.xlu0 %v174
    %v176 = vpop.xlane.xlu0 %175
    %v177 = vsel %vm139, %v169, 0.0
    %178 = vadd.xlane.f32.xlu0 %v177
    %v179 = vpop.xlane.xlu0 %178
    %v180 = vsel %vm139, %v170, 0.0
    %181 = vadd.xlane.f32.xlu0 %v180
    %v182 = vpop.xlane.xlu0 %181
    %v183 = vmul.f32 %v173, %v158
    %v184 = vmul.f32 %v176, %v158
    %v185 = vmul.f32 %v179, %v158
    %v186 = vmul.f32 %v182, %v158
    %v187 = vadd.f32 %v183, 1e-05
    %v188 = vadd.f32 %v184, 1e-05
    %v189 = vadd.f32 %v185, 1e-05
    %v190 = vadd.f32 %v186, 1e-05
    %v191 = vrsqrt.pop %v187
    %v192 = vmul.f32 %v191, %v187
    %v193 = vmul.f32 %v192, %v191
    %v194 = vmul.f32 0.5, %v193
    %v195 = vsub.f32 1.5, %v194
    %v196 = vmul.f32 %v191, %v195
    %vm197 = vweird.f32 %v187
    %vm198 = vweird.f32 %v191
    %vm199 = vmor %vm197, %vm198
    %v200 = vsel %vm199, %v191, %v196
    %v201 = vrsqrt.pop %v188
    %v202 = vmul.f32 %v201, %v188
    %v203 = vmul.f32 %v202, %v201
    %v204 = vmul.f32 0.5, %v203
    %v205 = vsub.f32 1.5, %v204
    %v206 = vmul.f32 %v201, %v205
    %vm207 = vweird.f32 %v188
    %vm208 = vweird.f32 %v201
    %vm209 = vmor %vm207, %vm208
    %v210 = vsel %vm209, %v201, %v206
    %v211 = vrsqrt.pop %v189
    %v212 = vmul.f32 %v211, %v189
    %v213 = vmul.f32 %v212, %v211
    %v214 = vmul.f32 0.5, %v213
    %v215 = vsub.f32 1.5, %v214
    %v216 = vmul.f32 %v211, %v215
    %vm217 = vweird.f32 %v189
    %vm218 = vweird.f32 %v211
    %vm219 = vmor %vm217, %vm218
    %v220 = vsel %vm219, %v211, %v216
    %v221 = vrsqrt.pop %v190
    %v222 = vmul.f32 %v221, %v190
    %v223 = vmul.f32 %v222, %v221
    %v224 = vmul.f32 0.5, %v223
    %v225 = vsub.f32 1.5, %v224
    %v226 = vmul.f32 %v221, %v225
    %vm227 = vweird.f32 %v190
    %vm228 = vweird.f32 %v221
    %vm229 = vmor %vm227, %vm228
    %v230 = vsel %vm229, %v221, %v226
    %v231 = vmul.f32 %v163, %v200
    %v232 = vmul.f32 %v164, %v210
    %v233 = vmul.f32 %v165, %v220
    %v234 = vmul.f32 %v166, %v230
    %v235 = vperm.slane %v57, 1
    %v236 = vmul.f32 %v231, %v235
    %v237 = vmul.f32 %v232, %v235
    %v238 = vmul.f32 %v233, %v235
    %v239 = vmul.f32 %v234, %v235
    %v240 = vperm.slane %v57, 2
    %v241 = vadd.f32 %v236, %v240
    %v242 = vadd.f32 %v237, %v240
    %v243 = vadd.f32 %v238, %v240
    %v244 = vadd.f32 %v239, %v240
    %v245 = vperm.slane %v57, 3
    %v247 = vsel %vm139, %v241, 0
    %v250 = vsel %vm139, %v242, 0
    %v253 = vsel %vm139, %v243, 0
    %v256 = vsel %vm139, %v244, 0
    %258 = vmatpush.msra.mxu0 0.0
    %259 = vmatpush.msra.mxu0 0.0
    %260 = vmatpush.msra.mxu0 0.0
    %261 = vmatpush.msra.mxu0 0.0
    %262 = vmatpush.msra.mxu0 0.0
    %263 = vmatpush.msra.mxu0 0.0
    %264 = vmatpush.msra.mxu0 0.0
    %265 = vmatpush.msra.mxu0 0.0
    %266 = vmatpush.msra.mxu0 0.0
    %267 = vmatpush.msra.mxu0 0.0
    %268 = vmatpush.msra.mxu0 0.0
    %269 = vmatpush.msra.mxu0 0.0
    %270 = vmatpush.msra.mxu0 %v122
    %271 = vmatpush.msra.mxu0 %v121
    %272 = vmatpush.msra.mxu0 %v120
    %273 = vmatpush.msra.mxu0 %v119
    %274 = vmatmul.f32.gmra.mxu0 %v247
    %v275 = vpop.f32.mrf.mxu0
    %v276 = vadd.f32 %v245, %v275
    %277 = vmatmul.f32.gmra.mxu0 %v250
    %v278 = vpop.f32.mrf.mxu0
    %v279 = vadd.f32 %v245, %v278
    %280 = vmatmul.f32.gmra.mxu0 %v253
    %v281 = vpop.f32.mrf.mxu0
    %v282 = vadd.f32 %v245, %v281
    %283 = vmatmul.f32.gmra.mxu0 %v256
    %v284 = vpop.f32.mrf.mxu0
    %v285 = vadd.f32 %v245, %v284
    %286 = vdwg.mxu0
    %291 = vrot.lane.b32.xlu0 %v276, 120
    %v292 = vpop.permute.xlu0 %291
    %293 = vrot.lane.b32.xlu0 %v279, 120
    %v294 = vpop.permute.xlu0 %293
    %295 = vrot.lane.b32.xlu0 %v282, 120
    %v296 = vpop.permute.xlu0 %295
    %297 = vrot.lane.b32.xlu0 %v285, 120
    %v298 = vpop.permute.xlu0 %297
    %299 = vrot.lane.b32.xlu0 %v276, 112
    %v300 = vpop.permute.xlu0 %299
    %301 = vrot.lane.b32.xlu0 %v279, 112
    %v302 = vpop.permute.xlu0 %301
    %303 = vrot.lane.b32.xlu0 %v282, 112
    %v304 = vpop.permute.xlu0 %303
    %305 = vrot.lane.b32.xlu0 %v285, 112
    %v306 = vpop.permute.xlu0 %305
    %307 = vrot.lane.b32.xlu0 %v276, 104
    %v308 = vpop.permute.xlu0 %307
    %309 = vrot.lane.b32.xlu0 %v279, 104
    %v310 = vpop.permute.xlu0 %309
    %311 = vrot.lane.b32.xlu0 %v282, 104
    %v312 = vpop.permute.xlu0 %311
    %313 = vrot.lane.b32.xlu0 %v285, 104
    %v314 = vpop.permute.xlu0 %313
    %315 = vrot.lane.b32.xlu0 %v276, 96
    %v316 = vpop.permute.xlu0 %315
    %317 = vrot.lane.b32.xlu0 %v279, 96
    %v318 = vpop.permute.xlu0 %317
    %vm319 = vcmask 64512
    %v320 = vsel %vm319, %v276, 0
    %v322 = vsel %vm319, %v279, 0
    %v324 = vsel %vm319, %v316, 0
    %v326 = vsel %vm319, %v318, 0
    %328 = vmatpush.xpose.msra.mxu0 0.0
    %329 = vmatpush.xpose.msra.mxu0 0.0
    %330 = vmatpush.xpose.msra.mxu0 0.0
    %331 = vmatpush.xpose.msra.mxu0 0.0
    %332 = vmatpush.xpose.msra.mxu0 0.0
    %333 = vmatpush.xpose.msra.mxu0 0.0
    %334 = vmatpush.xpose.msra.mxu0 0.0
    %335 = vmatpush.xpose.msra.mxu0 0.0
    %336 = vmatpush.xpose.msra.mxu0 0.0
    %337 = vmatpush.xpose.msra.mxu0 0.0
    %338 = vmatpush.xpose.msra.mxu0 0.0
    %339 = vmatpush.xpose.msra.mxu0 0.0
    %340 = vmatpush.xpose.msra.mxu0 0.0
    %341 = vmatpush.xpose.msra.mxu0 0.0
    %342 = vmatpush.xpose.msra.mxu0 %v326
    %343 = vmatpush.xpose.msra.mxu0 %v324
    %344 = vmatmul.f32.gmra.mxu0 %v320
    %v345 = vpop.f32.mrf.mxu0
    %v346 = vadd.f32 0.0, %v345
    %347 = vmatmul.f32.gmra.mxu0 %v322
    %v348 = vpop.f32.mrf.mxu0
    %v349 = vadd.f32 0.0, %v348
    %350 = vdwg.mxu0
    %351 = vrot.lane.b32.xlu0 %v282, 96
    %v352 = vpop.permute.xlu0 %351
    %353 = vrot.lane.b32.xlu0 %v285, 96
    %v354 = vpop.permute.xlu0 %353
    %v355 = vsel %vm319, %v282, 0
    %v357 = vsel %vm319, %v285, 0
    %v359 = vsel %vm319, %v352, 0
    %v361 = vsel %vm319, %v354, 0
    %363 = vmatpush.xpose.msra.mxu0 0.0
    %364 = vmatpush.xpose.msra.mxu0 0.0
    %365 = vmatpush.xpose.msra.mxu0 0.0
    %366 = vmatpush.xpose.msra.mxu0 0.0
    %367 = vmatpush.xpose.msra.mxu0 0.0
    %368 = vmatpush.xpose.msra.mxu0 0.0
    %369 = vmatpush.xpose.msra.mxu0 0.0
    %370 = vmatpush.xpose.msra.mxu0 0.0
    %371 = vmatpush.xpose.msra.mxu0 0.0
    %372 = vmatpush.xpose.msra.mxu0 0.0
    %373 = vmatpush.xpose.msra.mxu0 0.0
    %374 = vmatpush.xpose.msra.mxu0 0.0
    %375 = vmatpush.xpose.msra.mxu0 0.0
    %376 = vmatpush.xpose.msra.mxu0 0.0
    %377 = vmatpush.xpose.msra.mxu0 %v361
    %378 = vmatpush.xpose.msra.mxu0 %v359
    %379 = vmatmul.f32.gmra.mxu0 %v355
    %v380 = vpop.f32.mrf.mxu0
    %v381 = vadd.f32 0.0, %v380
    %382 = vmatmul.f32.gmra.mxu0 %v357
    %v383 = vpop.f32.mrf.mxu0
    %v384 = vadd.f32 0.0, %v383
    %385 = vdwg.mxu0
    %386 = vrot.lane.b32.xlu0 %v292, 96
    %v387 = vpop.permute.xlu0 %386
    %388 = vrot.lane.b32.xlu0 %v294, 96
    %v389 = vpop.permute.xlu0 %388
    %v390 = vsel %vm319, %v292, 0
    %v392 = vsel %vm319, %v294, 0
    %v394 = vsel %vm319, %v387, 0
    %v396 = vsel %vm319, %v389, 0
    %398 = vmatpush.xpose.msra.mxu0 0.0
    %399 = vmatpush.xpose.msra.mxu0 0.0
    %400 = vmatpush.xpose.msra.mxu0 0.0
    %401 = vmatpush.xpose.msra.mxu0 0.0
    %402 = vmatpush.xpose.msra.mxu0 0.0
    %403 = vmatpush.xpose.msra.mxu0 0.0
    %404 = vmatpush.xpose.msra.mxu0 0.0
    %405 = vmatpush.xpose.msra.mxu0 0.0
    %406 = vmatpush.xpose.msra.mxu0 0.0
    %407 = vmatpush.xpose.msra.mxu0 0.0
    %408 = vmatpush.xpose.msra.mxu0 0.0
    %409 = vmatpush.xpose.msra.mxu0 0.0
    %410 = vmatpush.xpose.msra.mxu0 0.0
    %411 = vmatpush.xpose.msra.mxu0 0.0
    %412 = vmatpush.xpose.msra.mxu0 %v396
    %413 = vmatpush.xpose.msra.mxu0 %v394
    %414 = vmatmul.f32.gmra.mxu0 %v390
    %v415 = vpop.f32.mrf.mxu0
    %v416 = vadd.f32 0.0, %v415
    %417 = vmatmul.f32.gmra.mxu0 %v392
    %v418 = vpop.f32.mrf.mxu0
    %v419 = vadd.f32 0.0, %v418
    %420 = vdwg.mxu0
    %421 = vrot.lane.b32.xlu0 %v296, 96
    %v422 = vpop.permute.xlu0 %421
    %423 = vrot.lane.b32.xlu0 %v298, 96
    %v424 = vpop.permute.xlu0 %423
    %v425 = vsel %vm319, %v296, 0
    %v427 = vsel %vm319, %v298, 0
    %v429 = vsel %vm319, %v422, 0
    %v431 = vsel %vm319, %v424, 0
    %433 = vmatpush.xpose.msra.mxu0 0.0
    %434 = vmatpush.xpose.msra.mxu0 0.0
    %435 = vmatpush.xpose.msra.mxu0 0.0
    %436 = vmatpush.xpose.msra.mxu0 0.0
    %437 = vmatpush.xpose.msra.mxu0 0.0
    %438 = vmatpush.xpose.msra.mxu0 0.0
    %439 = vmatpush.xpose.msra.mxu0 0.0
    %440 = vmatpush.xpose.msra.mxu0 0.0
    %441 = vmatpush.xpose.msra.mxu0 0.0
    %442 = vmatpush.xpose.msra.mxu0 0.0
    %443 = vmatpush.xpose.msra.mxu0 0.0
    %444 = vmatpush.xpose.msra.mxu0 0.0
    %445 = vmatpush.xpose.msra.mxu0 0.0
    %446 = vmatpush.xpose.msra.mxu0 0.0
    %447 = vmatpush.xpose.msra.mxu0 %v431
    %448 = vmatpush.xpose.msra.mxu0 %v429
    %449 = vmatmul.f32.gmra.mxu0 %v425
    %v450 = vpop.f32.mrf.mxu0
    %v451 = vadd.f32 0.0, %v450
    %452 = vmatmul.f32.gmra.mxu0 %v427
    %v453 = vpop.f32.mrf.mxu0
    %v454 = vadd.f32 0.0, %v453
    %455 = vdwg.mxu0
    %456 = vrot.lane.b32.xlu0 %v300, 96
    %v457 = vpop.permute.xlu0 %456
    %458 = vrot.lane.b32.xlu0 %v302, 96
    %v459 = vpop.permute.xlu0 %458
    %v460 = vsel %vm319, %v300, 0
    %v462 = vsel %vm319, %v302, 0
    %v464 = vsel %vm319, %v457, 0
    %v466 = vsel %vm319, %v459, 0
    %468 = vmatpush.xpose.msra.mxu0 0.0
    %469 = vmatpush.xpose.msra.mxu0 0.0
    %470 = vmatpush.xpose.msra.mxu0 0.0
    %471 = vmatpush.xpose.msra.mxu0 0.0
    %472 = vmatpush.xpose.msra.mxu0 0.0
    %473 = vmatpush.xpose.msra.mxu0 0.0
    %474 = vmatpush.xpose.msra.mxu0 0.0
    %475 = vmatpush.xpose.msra.mxu0 0.0
    %476 = vmatpush.xpose.msra.mxu0 0.0
    %477 = vmatpush.xpose.msra.mxu0 0.0
    %478 = vmatpush.xpose.msra.mxu0 0.0
    %479 = vmatpush.xpose.msra.mxu0 0.0
    %480 = vmatpush.xpose.msra.mxu0 0.0
    %481 = vmatpush.xpose.msra.mxu0 0.0
    %482 = vmatpush.xpose.msra.mxu0 %v466
    %483 = vmatpush.xpose.msra.mxu0 %v464
    %484 = vmatmul.f32.gmra.mxu0 %v460
    %v485 = vpop.f32.mrf.mxu0
    %v486 = vadd.f32 0.0, %v485
    %487 = vmatmul.f32.gmra.mxu0 %v462
    %v488 = vpop.f32.mrf.mxu0
    %v489 = vadd.f32 0.0, %v488
    %490 = vdwg.mxu0
    %491 = vrot.lane.b32.xlu0 %v304, 96
    %v492 = vpop.permute.xlu0 %491
    %493 = vrot.lane.b32.xlu0 %v306, 96
    %v494 = vpop.permute.xlu0 %493
    %v495 = vsel %vm319, %v304, 0
    %v497 = vsel %vm319, %v306, 0
    %v499 = vsel %vm319, %v492, 0
    %v501 = vsel %vm319, %v494, 0
    %503 = vmatpush.xpose.msra.mxu0 0.0
    %504 = vmatpush.xpose.msra.mxu0 0.0
    %505 = vmatpush.xpose.msra.mxu0 0.0
    %506 = vmatpush.xpose.msra.mxu0 0.0
    %507 = vmatpush.xpose.msra.mxu0 0.0
    %508 = vmatpush.xpose.msra.mxu0 0.0
    %509 = vmatpush.xpose.msra.mxu0 0.0
    %510 = vmatpush.xpose.msra.mxu0 0.0
    %511 = vmatpush.xpose.msra.mxu0 0.0
    %512 = vmatpush.xpose.msra.mxu0 0.0
    %513 = vmatpush.xpose.msra.mxu0 0.0
    %514 = vmatpush.xpose.msra.mxu0 0.0
    %515 = vmatpush.xpose.msra.mxu0 0.0
    %516 = vmatpush.xpose.msra.mxu0 0.0
    %517 = vmatpush.xpose.msra.mxu0 %v501
    %518 = vmatpush.xpose.msra.mxu0 %v499
    %519 = vmatmul.f32.gmra.mxu0 %v495
    %v520 = vpop.f32.mrf.mxu0
    %v521 = vadd.f32 0.0, %v520
    %522 = vmatmul.f32.gmra.mxu0 %v497
    %v523 = vpop.f32.mrf.mxu0
    %v524 = vadd.f32 0.0, %v523
    %525 = vdwg.mxu0
    %526 = vrot.lane.b32.xlu0 %v308, 96
    %v527 = vpop.permute.xlu0 %526
    %528 = vrot.lane.b32.xlu0 %v310, 96
    %v529 = vpop.permute.xlu0 %528
    %v530 = vsel %vm319, %v308, 0
    %v532 = vsel %vm319, %v310, 0
    %v534 = vsel %vm319, %v527, 0
    %v536 = vsel %vm319, %v529, 0
    %538 = vmatpush.xpose.msra.mxu0 0.0
    %539 = vmatpush.xpose.msra.mxu0 0.0
    %540 = vmatpush.xpose.msra.mxu0 0.0
    %541 = vmatpush.xpose.msra.mxu0 0.0
    %542 = vmatpush.xpose.msra.mxu0 0.0
    %543 = vmatpush.xpose.msra.mxu0 0.0
    %544 = vmatpush.xpose.msra.mxu0 0.0
    %545 = vmatpush.xpose.msra.mxu0 0.0
    %546 = vmatpush.xpose.msra.mxu0 0.0
    %547 = vmatpush.xpose.msra.mxu0 0.0
    %548 = vmatpush.xpose.msra.mxu0 0.0
    %549 = vmatpush.xpose.msra.mxu0 0.0
    %550 = vmatpush.xpose.msra.mxu0 0.0
    %551 = vmatpush.xpose.msra.mxu0 0.0
    %552 = vmatpush.xpose.msra.mxu0 %v536
    %553 = vmatpush.xpose.msra.mxu0 %v534
    %554 = vmatmul.f32.gmra.mxu0 %v530
    %v555 = vpop.f32.mrf.mxu0
    %v556 = vadd.f32 0.0, %v555
    %557 = vmatmul.f32.gmra.mxu0 %v532
    %v558 = vpop.f32.mrf.mxu0
    %v559 = vadd.f32 0.0, %v558
    %560 = vdwg.mxu0
    %561 = vrot.lane.b32.xlu0 %v312, 96
    %v562 = vpop.permute.xlu0 %561
    %563 = vrot.lane.b32.xlu0 %v314, 96
    %v564 = vpop.permute.xlu0 %563
    %v565 = vsel %vm319, %v312, 0
    %v567 = vsel %vm319, %v314, 0
    %v569 = vsel %vm319, %v562, 0
    %v571 = vsel %vm319, %v564, 0
    %573 = vmatpush.xpose.msra.mxu0 0.0
    %574 = vmatpush.xpose.msra.mxu0 0.0
    %575 = vmatpush.xpose.msra.mxu0 0.0
    %576 = vmatpush.xpose.msra.mxu0 0.0
    %577 = vmatpush.xpose.msra.mxu0 0.0
    %578 = vmatpush.xpose.msra.mxu0 0.0
    %579 = vmatpush.xpose.msra.mxu0 0.0
    %580 = vmatpush.xpose.msra.mxu0 0.0
    %581 = vmatpush.xpose.msra.mxu0 0.0
    %582 = vmatpush.xpose.msra.mxu0 0.0
    %583 = vmatpush.xpose.msra.mxu0 0.0
    %584 = vmatpush.xpose.msra.mxu0 0.0
    %585 = vmatpush.xpose.msra.mxu0 0.0
    %586 = vmatpush.xpose.msra.mxu0 0.0
    %587 = vmatpush.xpose.msra.mxu0 %v571
    %588 = vmatpush.xpose.msra.mxu0 %v569
    %589 = vmatmul.f32.gmra.mxu0 %v565
    %v590 = vpop.f32.mrf.mxu0
    %v591 = vadd.f32 0.0, %v590
    %592 = vmatmul.f32.gmra.mxu0 %v567
    %v593 = vpop.f32.mrf.mxu0
    %v594 = vadd.f32 0.0, %v593
    %595 = vdwg.mxu0
    %vm596 = vcmask 130048
    %v597 = vsel %vm596, %v346, -inf
    %598 = vmax.xlane.f32.xlu0 %v597
    %v599 = vpop.xlane.xlu0 %598
    %v600 = vsel %vm596, %v349, -inf
    %601 = vmax.xlane.f32.xlu0 %v600
    %v602 = vpop.xlane.xlu0 %601
    %v603 = vsel %vm596, %v381, -inf
    %604 = vmax.xlane.f32.xlu0 %v603
    %v605 = vpop.xlane.xlu0 %604
    %v606 = vsel %vm596, %v384, -inf
    %607 = vmax.xlane.f32.xlu0 %v606
    %v608 = vpop.xlane.xlu0 %607
    %v609 = vsel %vm596, %v416, -inf
    %610 = vmax.xlane.f32.xlu0 %v609
    %v611 = vpop.xlane.xlu0 %610
    %v612 = vsel %vm596, %v419, -inf
    %613 = vmax.xlane.f32.xlu0 %v612
    %v614 = vpop.xlane.xlu0 %613
    %v615 = vsel %vm596, %v451, -inf
    %616 = vmax.xlane.f32.xlu0 %v615
    %v617 = vpop.xlane.xlu0 %616
    %v618 = vsel %vm596, %v454, -inf
    %619 = vmax.xlane.f32.xlu0 %v618
    %v620 = vpop.xlane.xlu0 %619
    %v621 = vsel %vm596, %v486, -inf
    %622 = vmax.xlane.f32.xlu0 %v621
    %v623 = vpop.xlane.xlu0 %622
    %v624 = vsel %vm596, %v489, -inf
    %625 = vmax.xlane.f32.xlu0 %v624
    %v626 = vpop.xlane.xlu0 %625
    %v627 = vsel %vm596, %v521, -inf
    %628 = vmax.xlane.f32.xlu0 %v627
    %v629 = vpop.xlane.xlu0 %628
    %v630 = vsel %vm596, %v524, -inf
    %631 = vmax.xlane.f32.xlu0 %v630
    %v632 = vpop.xlane.xlu0 %631
    %v633 = vsel %vm596, %v556, -inf
    %634 = vmax.xlane.f32.xlu0 %v633
    %v635 = vpop.xlane.xlu0 %634
    %v636 = vsel %vm596, %v559, -inf
    %637 = vmax.xlane.f32.xlu0 %v636
    %v638 = vpop.xlane.xlu0 %637
    %v639 = vsel %vm596, %v591, -inf
    %640 = vmax.xlane.f32.xlu0 %v639
    %v641 = vpop.xlane.xlu0 %640
    %v642 = vsel %vm596, %v594, -inf
    %643 = vmax.xlane.f32.xlu0 %v642
    %v644 = vpop.xlane.xlu0 %643
    %v645 = vsub.f32 %v346, %v599
    %v646 = vsub.f32 %v349, %v602
    %v647 = vsub.f32 %v381, %v605
    %v648 = vsub.f32 %v384, %v608
    %v649 = vsub.f32 %v416, %v611
    %v650 = vsub.f32 %v419, %v614
    %v651 = vsub.f32 %v451, %v617
    %v652 = vsub.f32 %v454, %v620
    %v653 = vsub.f32 %v486, %v623
    %v654 = vsub.f32 %v489, %v626
    %v655 = vsub.f32 %v521, %v629
    %v656 = vsub.f32 %v524, %v632
    %v657 = vsub.f32 %v556, %v635
    %v658 = vsub.f32 %v559, %v638
    %v659 = vsub.f32 %v591, %v641
    %v660 = vsub.f32 %v594, %v644
    %v661 = vmul.f32 %v645, 1.442695
    %v662 = vpow.pop %v661
    %v663 = vmul.f32 %v646, 1.442695
    %v664 = vpow.pop %v663
    %v665 = vmul.f32 %v647, 1.442695
    %v666 = vpow.pop %v665
    %v667 = vmul.f32 %v648, 1.442695
    %v668 = vpow.pop %v667
    %v669 = vmul.f32 %v649, 1.442695
    %v670 = vpow.pop %v669
    %v671 = vmul.f32 %v650, 1.442695
    %v672 = vpow.pop %v671
    %v673 = vmul.f32 %v651, 1.442695
    %v674 = vpow.pop %v673
    %v675 = vmul.f32 %v652, 1.442695
    %v676 = vpow.pop %v675
    %v677 = vmul.f32 %v653, 1.442695
    %v678 = vpow.pop %v677
    %v679 = vmul.f32 %v654, 1.442695
    %v680 = vpow.pop %v679
    %v681 = vmul.f32 %v655, 1.442695
    %v682 = vpow.pop %v681
    %v683 = vmul.f32 %v656, 1.442695
    %v684 = vpow.pop %v683
    %v685 = vmul.f32 %v657, 1.442695
    %v686 = vpow.pop %v685
    %v687 = vmul.f32 %v658, 1.442695
    %v688 = vpow.pop %v687
    %v689 = vmul.f32 %v659, 1.442695
    %v690 = vpow.pop %v689
    %v691 = vmul.f32 %v660, 1.442695
    %v692 = vpow.pop %v691
    %v693 = vsel %vm596, %v662, 0.0
    %694 = vadd.xlane.f32.xlu0 %v693
    %v695 = vpop.xlane.xlu0 %694
    %v696 = vsel %vm596, %v664, 0.0
    %697 = vadd.xlane.f32.xlu0 %v696
    %v698 = vpop.xlane.xlu0 %697
    %v699 = vsel %vm596, %v666, 0.0
    %700 = vadd.xlane.f32.xlu0 %v699
    %v701 = vpop.xlane.xlu0 %700
    %v702 = vsel %vm596, %v668, 0.0
    %703 = vadd.xlane.f32.xlu0 %v702
    %v704 = vpop.xlane.xlu0 %703
    %v705 = vsel %vm596, %v670, 0.0
    %706 = vadd.xlane.f32.xlu0 %v705
    %v707 = vpop.xlane.xlu0 %706
    %v708 = vsel %vm596, %v672, 0.0
    %709 = vadd.xlane.f32.xlu0 %v708
    %v710 = vpop.xlane.xlu0 %709
    %v711 = vsel %vm596, %v674, 0.0
    %712 = vadd.xlane.f32.xlu0 %v711
    %v713 = vpop.xlane.xlu0 %712
    %v714 = vsel %vm596, %v676, 0.0
    %715 = vadd.xlane.f32.xlu0 %v714
    %v716 = vpop.xlane.xlu0 %715
    %v717 = vsel %vm596, %v678, 0.0
    %718 = vadd.xlane.f32.xlu0 %v717
    %v719 = vpop.xlane.xlu0 %718
    %v720 = vsel %vm596, %v680, 0.0
    %721 = vadd.xlane.f32.xlu0 %v720
    %v722 = vpop.xlane.xlu0 %721
    %v723 = vsel %vm596, %v682, 0.0
    %724 = vadd.xlane.f32.xlu0 %v723
    %v725 = vpop.xlane.xlu0 %724
    %v726 = vsel %vm596, %v684, 0.0
    %727 = vadd.xlane.f32.xlu0 %v726
    %v728 = vpop.xlane.xlu0 %727
    %v729 = vsel %vm596, %v686, 0.0
    %730 = vadd.xlane.f32.xlu0 %v729
    %v731 = vpop.xlane.xlu0 %730
    %v732 = vsel %vm596, %v688, 0.0
    %733 = vadd.xlane.f32.xlu0 %v732
    %v734 = vpop.xlane.xlu0 %733
    %v735 = vsel %vm596, %v690, 0.0
    %736 = vadd.xlane.f32.xlu0 %v735
    %v737 = vpop.xlane.xlu0 %736
    %v738 = vsel %vm596, %v692, 0.0
    %739 = vadd.xlane.f32.xlu0 %v738
    %v740 = vpop.xlane.xlu0 %739
    %v741 = vrcp.pop %v695
    %v742 = vrcp.pop %v698
    %v743 = vrcp.pop %v701
    %v744 = vrcp.pop %v704
    %v745 = vrcp.pop %v707
    %v746 = vrcp.pop %v710
    %v747 = vrcp.pop %v713
    %v748 = vrcp.pop %v716
    %v749 = vrcp.pop %v719
    %v750 = vrcp.pop %v722
    %v751 = vrcp.pop %v725
    %v752 = vrcp.pop %v728
    %v753 = vrcp.pop %v731
    %v754 = vrcp.pop %v734
    %v755 = vrcp.pop %v737
    %v756 = vrcp.pop %v740
    %v757 = vmul.f32 %v662, %v741
    %v758 = vmul.f32 %v664, %v742
    %v759 = vmul.f32 %v666, %v743
    %v760 = vmul.f32 %v668, %v744
    %v761 = vmul.f32 %v670, %v745
    %v762 = vmul.f32 %v672, %v746
    %v763 = vmul.f32 %v674, %v747
    %v764 = vmul.f32 %v676, %v748
    %v765 = vmul.f32 %v678, %v749
    %v766 = vmul.f32 %v680, %v750
    %v767 = vmul.f32 %v682, %v751
    %v768 = vmul.f32 %v684, %v752
    %v769 = vmul.f32 %v686, %v753
    %v770 = vmul.f32 %v688, %v754
    %v771 = vmul.f32 %v690, %v755
    %v772 = vmul.f32 %v692, %v756
    %773 = vrot.lane.b32.xlu0 %v276, 64
    %v774 = vpop.permute.xlu0 %773
    %775 = vrot.lane.b32.xlu0 %v279, 64
    %v776 = vpop.permute.xlu0 %775
    %v780 = vsel %vm596, %v757, 0
    %v783 = vsel %vm596, %v758, 0
    %785 = vmatpush.msra.mxu0 0.0
    %786 = vmatpush.msra.mxu0 0.0
    %787 = vmatpush.msra.mxu0 0.0
    %788 = vmatpush.msra.mxu0 0.0
    %789 = vmatpush.msra.mxu0 0.0
    %790 = vmatpush.msra.mxu0 0.0
    %791 = vmatpush.msra.mxu0 0.0
    %792 = vmatpush.msra.mxu0 0.0
    %793 = vmatpush.msra.mxu0 0.0
    %794 = vmatpush.msra.mxu0 0.0
    %795 = vmatpush.msra.mxu0 0.0
    %796 = vmatpush.msra.mxu0 0.0
    %797 = vmatpush.msra.mxu0 0.0
    %798 = vmatpush.msra.mxu0 0.0
    %799 = vmatpush.msra.mxu0 %v776
    %800 = vmatpush.msra.mxu0 %v774
    %801 = vmatmul.f32.gmra.mxu0 %v780
    %v802 = vpop.f32.mrf.mxu0
    %v803 = vadd.f32 0.0, %v802
    %804 = vmatmul.f32.gmra.mxu0 %v783
    %v805 = vpop.f32.mrf.mxu0
    %v806 = vadd.f32 0.0, %v805
    %807 = vdwg.mxu0
    %808 = vrot.lane.b32.xlu0 %v282, 64
    %v809 = vpop.permute.xlu0 %808
    %810 = vrot.lane.b32.xlu0 %v285, 64
    %v811 = vpop.permute.xlu0 %810
    %v815 = vsel %vm596, %v759, 0
    %v818 = vsel %vm596, %v760, 0
    %820 = vmatpush.msra.mxu0 0.0
    %821 = vmatpush.msra.mxu0 0.0
    %822 = vmatpush.msra.mxu0 0.0
    %823 = vmatpush.msra.mxu0 0.0
    %824 = vmatpush.msra.mxu0 0.0
    %825 = vmatpush.msra.mxu0 0.0
    %826 = vmatpush.msra.mxu0 0.0
    %827 = vmatpush.msra.mxu0 0.0
    %828 = vmatpush.msra.mxu0 0.0
    %829 = vmatpush.msra.mxu0 0.0
    %830 = vmatpush.msra.mxu0 0.0
    %831 = vmatpush.msra.mxu0 0.0
    %832 = vmatpush.msra.mxu0 0.0
    %833 = vmatpush.msra.mxu0 0.0
    %834 = vmatpush.msra.mxu0 %v811
    %835 = vmatpush.msra.mxu0 %v809
    %836 = vmatmul.f32.gmra.mxu0 %v815
    %v837 = vpop.f32.mrf.mxu0
    %v838 = vadd.f32 0.0, %v837
    %839 = vmatmul.f32.gmra.mxu0 %v818
    %v840 = vpop.f32.mrf.mxu0
    %v841 = vadd.f32 0.0, %v840
    %842 = vdwg.mxu0
    %843 = vrot.lane.b32.xlu0 %v292, 64
    %v844 = vpop.permute.xlu0 %843
    %845 = vrot.lane.b32.xlu0 %v294, 64
    %v846 = vpop.permute.xlu0 %845
    %v850 = vsel %vm596, %v761, 0
    %v853 = vsel %vm596, %v762, 0
    %855 = vmatpush.msra.mxu0 0.0
    %856 = vmatpush.msra.mxu0 0.0
    %857 = vmatpush.msra.mxu0 0.0
    %858 = vmatpush.msra.mxu0 0.0
    %859 = vmatpush.msra.mxu0 0.0
    %860 = vmatpush.msra.mxu0 0.0
    %861 = vmatpush.msra.mxu0 0.0
    %862 = vmatpush.msra.mxu0 0.0
    %863 = vmatpush.msra.mxu0 0.0
    %864 = vmatpush.msra.mxu0 0.0
    %865 = vmatpush.msra.mxu0 0.0
    %866 = vmatpush.msra.mxu0 0.0
    %867 = vmatpush.msra.mxu0 0.0
    %868 = vmatpush.msra.mxu0 0.0
    %869 = vmatpush.msra.mxu0 %v846
    %870 = vmatpush.msra.mxu0 %v844
    %871 = vmatmul.f32.gmra.mxu0 %v850
    %v872 = vpop.f32.mrf.mxu0
    %v873 = vadd.f32 0.0, %v872
    %874 = vmatmul.f32.gmra.mxu0 %v853
    %v875 = vpop.f32.mrf.mxu0
    %v876 = vadd.f32 0.0, %v875
    %877 = vdwg.mxu0
    %878 = vrot.lane.b32.xlu0 %v296, 64
    %v879 = vpop.permute.xlu0 %878
    %880 = vrot.lane.b32.xlu0 %v298, 64
    %v881 = vpop.permute.xlu0 %880
    %v885 = vsel %vm596, %v763, 0
    %v888 = vsel %vm596, %v764, 0
    %890 = vmatpush.msra.mxu0 0.0
    %891 = vmatpush.msra.mxu0 0.0
    %892 = vmatpush.msra.mxu0 0.0
    %893 = vmatpush.msra.mxu0 0.0
    %894 = vmatpush.msra.mxu0 0.0
    %895 = vmatpush.msra.mxu0 0.0
    %896 = vmatpush.msra.mxu0 0.0
    %897 = vmatpush.msra.mxu0 0.0
    %898 = vmatpush.msra.mxu0 0.0
    %899 = vmatpush.msra.mxu0 0.0
    %900 = vmatpush.msra.mxu0 0.0
    %901 = vmatpush.msra.mxu0 0.0
    %902 = vmatpush.msra.mxu0 0.0
    %903 = vmatpush.msra.mxu0 0.0
    %904 = vmatpush.msra.mxu0 %v881
    %905 = vmatpush.msra.mxu0 %v879
    %906 = vmatmul.f32.gmra.mxu0 %v885
    %v907 = vpop.f32.mrf.mxu0
    %v908 = vadd.f32 0.0, %v907
    %909 = vmatmul.f32.gmra.mxu0 %v888
    %v910 = vpop.f32.mrf.mxu0
    %v911 = vadd.f32 0.0, %v910
    %912 = vdwg.mxu0
    %913 = vrot.lane.b32.xlu0 %v300, 64
    %v914 = vpop.permute.xlu0 %913
    %915 = vrot.lane.b32.xlu0 %v302, 64
    %v916 = vpop.permute.xlu0 %915
    %v920 = vsel %vm596, %v765, 0
    %v923 = vsel %vm596, %v766, 0
    %925 = vmatpush.msra.mxu0 0.0
    %926 = vmatpush.msra.mxu0 0.0
    %927 = vmatpush.msra.mxu0 0.0
    %928 = vmatpush.msra.mxu0 0.0
    %929 = vmatpush.msra.mxu0 0.0
    %930 = vmatpush.msra.mxu0 0.0
    %931 = vmatpush.msra.mxu0 0.0
    %932 = vmatpush.msra.mxu0 0.0
    %933 = vmatpush.msra.mxu0 0.0
    %934 = vmatpush.msra.mxu0 0.0
    %935 = vmatpush.msra.mxu0 0.0
    %936 = vmatpush.msra.mxu0 0.0
    %937 = vmatpush.msra.mxu0 0.0
    %938 = vmatpush.msra.mxu0 0.0
    %939 = vmatpush.msra.mxu0 %v916
    %940 = vmatpush.msra.mxu0 %v914
    %941 = vmatmul.f32.gmra.mxu0 %v920
    %v942 = vpop.f32.mrf.mxu0
    %v943 = vadd.f32 0.0, %v942
    %944 = vmatmul.f32.gmra.mxu0 %v923
    %v945 = vpop.f32.mrf.mxu0
    %v946 = vadd.f32 0.0, %v945
    %947 = vdwg.mxu0
    %948 = vrot.lane.b32.xlu0 %v304, 64
    %v949 = vpop.permute.xlu0 %948
    %950 = vrot.lane.b32.xlu0 %v306, 64
    %v951 = vpop.permute.xlu0 %950
    %v955 = vsel %vm596, %v767, 0
    %v958 = vsel %vm596, %v768, 0
    %960 = vmatpush.msra.mxu0 0.0
    %961 = vmatpush.msra.mxu0 0.0
    %962 = vmatpush.msra.mxu0 0.0
    %963 = vmatpush.msra.mxu0 0.0
    %964 = vmatpush.msra.mxu0 0.0
    %965 = vmatpush.msra.mxu0 0.0
    %966 = vmatpush.msra.mxu0 0.0
    %967 = vmatpush.msra.mxu0 0.0
    %968 = vmatpush.msra.mxu0 0.0
    %969 = vmatpush.msra.mxu0 0.0
    %970 = vmatpush.msra.mxu0 0.0
    %971 = vmatpush.msra.mxu0 0.0
    %972 = vmatpush.msra.mxu0 0.0
    %973 = vmatpush.msra.mxu0 0.0
    %974 = vmatpush.msra.mxu0 %v951
    %975 = vmatpush.msra.mxu0 %v949
    %976 = vmatmul.f32.gmra.mxu0 %v955
    %v977 = vpop.f32.mrf.mxu0
    %v978 = vadd.f32 0.0, %v977
    %979 = vmatmul.f32.gmra.mxu0 %v958
    %v980 = vpop.f32.mrf.mxu0
    %v981 = vadd.f32 0.0, %v980
    %982 = vdwg.mxu0
    %983 = vrot.lane.b32.xlu0 %v308, 64
    %v984 = vpop.permute.xlu0 %983
    %985 = vrot.lane.b32.xlu0 %v310, 64
    %v986 = vpop.permute.xlu0 %985
    %v990 = vsel %vm596, %v769, 0
    %v993 = vsel %vm596, %v770, 0
    %995 = vmatpush.msra.mxu0 0.0
    %996 = vmatpush.msra.mxu0 0.0
    %997 = vmatpush.msra.mxu0 0.0
    %998 = vmatpush.msra.mxu0 0.0
    %999 = vmatpush.msra.mxu0 0.0
    %1000 = vmatpush.msra.mxu0 0.0
    %1001 = vmatpush.msra.mxu0 0.0
    %1002 = vmatpush.msra.mxu0 0.0
    %1003 = vmatpush.msra.mxu0 0.0
    %1004 = vmatpush.msra.mxu0 0.0
    %1005 = vmatpush.msra.mxu0 0.0
    %1006 = vmatpush.msra.mxu0 0.0
    %1007 = vmatpush.msra.mxu0 0.0
    %1008 = vmatpush.msra.mxu0 0.0
    %1009 = vmatpush.msra.mxu0 %v986
    %1010 = vmatpush.msra.mxu0 %v984
    %1011 = vmatmul.f32.gmra.mxu0 %v990
    %v1012 = vpop.f32.mrf.mxu0
    %v1013 = vadd.f32 0.0, %v1012
    %1014 = vmatmul.f32.gmra.mxu0 %v993
    %v1015 = vpop.f32.mrf.mxu0
    %v1016 = vadd.f32 0.0, %v1015
    %1017 = vdwg.mxu0
    %1018 = vrot.lane.b32.xlu0 %v312, 64
    %v1019 = vpop.permute.xlu0 %1018
    %1020 = vrot.lane.b32.xlu0 %v314, 64
    %v1021 = vpop.permute.xlu0 %1020
    %v1025 = vsel %vm596, %v771, 0
    %v1028 = vsel %vm596, %v772, 0
    %1030 = vmatpush.msra.mxu0 0.0
    %1031 = vmatpush.msra.mxu0 0.0
    %1032 = vmatpush.msra.mxu0 0.0
    %1033 = vmatpush.msra.mxu0 0.0
    %1034 = vmatpush.msra.mxu0 0.0
    %1035 = vmatpush.msra.mxu0 0.0
    %1036 = vmatpush.msra.mxu0 0.0
    %1037 = vmatpush.msra.mxu0 0.0
    %1038 = vmatpush.msra.mxu0 0.0
    %1039 = vmatpush.msra.mxu0 0.0
    %1040 = vmatpush.msra.mxu0 0.0
    %1041 = vmatpush.msra.mxu0 0.0
    %1042 = vmatpush.msra.mxu0 0.0
    %1043 = vmatpush.msra.mxu0 0.0
    %1044 = vmatpush.msra.mxu0 %v1021
    %1045 = vmatpush.msra.mxu0 %v1019
    %1046 = vmatmul.f32.gmra.mxu0 %v1025
    %v1047 = vpop.f32.mrf.mxu0
    %v1048 = vadd.f32 0.0, %v1047
    %1049 = vmatmul.f32.gmra.mxu0 %v1028
    %v1050 = vpop.f32.mrf.mxu0
    %v1051 = vadd.f32 0.0, %v1050
    %1052 = vdwg.mxu0
    %1057 = vrot.lane.b32.xlu0 %v873, 8
    %v1058 = vpop.permute.xlu0 %1057
    %1059 = vrot.lane.b32.xlu0 %v876, 8
    %v1060 = vpop.permute.xlu0 %1059
    %1061 = vrot.lane.b32.xlu0 %v908, 8
    %v1062 = vpop.permute.xlu0 %1061
    %1063 = vrot.lane.b32.xlu0 %v911, 8
    %v1064 = vpop.permute.xlu0 %1063
    %1073 = vrot.lane.b32.xlu0 %v943, 16
    %v1074 = vpop.permute.xlu0 %1073
    %1075 = vrot.lane.b32.xlu0 %v946, 16
    %v1076 = vpop.permute.xlu0 %1075
    %1077 = vrot.lane.b32.xlu0 %v978, 16
    %v1078 = vpop.permute.xlu0 %1077
    %1079 = vrot.lane.b32.xlu0 %v981, 16
    %v1080 = vpop.permute.xlu0 %1079
    %1089 = vrot.lane.b32.xlu0 %v1013, 24
    %v1090 = vpop.permute.xlu0 %1089
    %1091 = vrot.lane.b32.xlu0 %v1016, 24
    %v1092 = vpop.permute.xlu0 %1091
    %1093 = vrot.lane.b32.xlu0 %v1048, 24
    %v1094 = vpop.permute.xlu0 %1093
    %1095 = vrot.lane.b32.xlu0 %v1051, 24
    %v1096 = vpop.permute.xlu0 %1095
    %v1101 = vsel %vm319, %v803, %v1058
    %v1102 = vsel %vm319, %v806, %v1060
    %v1103 = vsel %vm319, %v838, %v1062
    %v1104 = vsel %vm319, %v841, %v1064
    %v1105 = vsel %vm596, %v1101, %v1074
    %v1106 = vsel %vm596, %v1102, %v1076
    %v1107 = vsel %vm596, %v1103, %v1078
    %v1108 = vsel %vm596, %v1104, %v1080
    %vm1109 = vcmask 195584
    %v1110 = vsel %vm1109, %v1105, %v1090
    %v1111 = vsel %vm1109, %v1106, %v1092
    %v1112 = vsel %vm1109, %v1107, %v1094
    %v1113 = vsel %vm1109, %v1108, %v1096
    %v1115 = vsel %vm139, %v1110, 0
    %v1118 = vsel %vm139, %v1111, 0
    %v1121 = vsel %vm139, %v1112, 0
    %v1124 = vsel %vm139, %v1113, 0
    %1126 = vmatpush.msra.mxu0 0.0
    %1127 = vmatpush.msra.mxu0 0.0
    %1128 = vmatpush.msra.mxu0 0.0
    %1129 = vmatpush.msra.mxu0 0.0
    %1130 = vmatpush.msra.mxu0 0.0
    %1131 = vmatpush.msra.mxu0 0.0
    %1132 = vmatpush.msra.mxu0 0.0
    %1133 = vmatpush.msra.mxu0 0.0
    %1134 = vmatpush.msra.mxu0 0.0
    %1135 = vmatpush.msra.mxu0 0.0
    %1136 = vmatpush.msra.mxu0 0.0
    %1137 = vmatpush.msra.mxu0 0.0
    %1138 = vmatpush.msra.mxu0 %v126
    %1139 = vmatpush.msra.mxu0 %v125
    %1140 = vmatpush.msra.mxu0 %v124
    %1141 = vmatpush.msra.mxu0 %v123
    %1142 = vmatmul.f32.gmra.mxu0 %v1115
    %v1143 = vpop.f32.mrf.mxu0
    %v1144 = vadd.f32 0.0, %v1143
    %1145 = vmatmul.f32.gmra.mxu0 %v1118
    %v1146 = vpop.f32.mrf.mxu0
    %v1147 = vadd.f32 0.0, %v1146
    %1148 = vmatmul.f32.gmra.mxu0 %v1121
    %v1149 = vpop.f32.mrf.mxu0
    %v1150 = vadd.f32 0.0, %v1149
    %1151 = vmatmul.f32.gmra.mxu0 %v1124
    %v1152 = vpop.f32.mrf.mxu0
    %v1153 = vadd.f32 0.0, %v1152
    %1154 = vdwg.mxu0
    %v1155 = vadd.f32 %v115, %v1144
    %v1156 = vadd.f32 %v116, %v1147
    %v1157 = vadd.f32 %v117, %v1150
    %v1158 = vadd.f32 %v118, %v1153
    %v1159 = vperm.slane %v57, 4
    %v1160 = vadd.f32 %v1155, %v1159
    %v1161 = vadd.f32 %v1156, %v1159
    %v1162 = vadd.f32 %v1157, %v1159
    %v1163 = vadd.f32 %v1158, %v1159
    %v1164 = vsel %vm139, %v1160, 0.0
    %1165 = vadd.xlane.f32.xlu0 %v1164
    %v1166 = vpop.xlane.xlu0 %1165
    %v1167 = vsel %vm139, %v1161, 0.0
    %1168 = vadd.xlane.f32.xlu0 %v1167
    %v1169 = vpop.xlane.xlu0 %1168
    %v1170 = vsel %vm139, %v1162, 0.0
    %1171 = vadd.xlane.f32.xlu0 %v1170
    %v1172 = vpop.xlane.xlu0 %1171
    %v1173 = vsel %vm139, %v1163, 0.0
    %1174 = vadd.xlane.f32.xlu0 %v1173
    %v1175 = vpop.xlane.xlu0 %1174
    %v1176 = vmul.f32 %v1166, %v158
    %v1177 = vmul.f32 %v1169, %v158
    %v1178 = vmul.f32 %v1172, %v158
    %v1179 = vmul.f32 %v1175, %v158
    %v1180 = vsub.f32 %v1160, %v1176
    %v1181 = vsub.f32 %v1161, %v1177
    %v1182 = vsub.f32 %v1162, %v1178
    %v1183 = vsub.f32 %v1163, %v1179
    %v1184 = vmul.f32 %v1180, %v1180
    %v1185 = vmul.f32 %v1181, %v1181
    %v1186 = vmul.f32 %v1182, %v1182
    %v1187 = vmul.f32 %v1183, %v1183
    %v1188 = vsel %vm139, %v1184, 0.0
    %1189 = vadd.xlane.f32.xlu0 %v1188
    %v1190 = vpop.xlane.xlu0 %1189
    %v1191 = vsel %vm139, %v1185, 0.0
    %1192 = vadd.xlane.f32.xlu0 %v1191
    %v1193 = vpop.xlane.xlu0 %1192
    %v1194 = vsel %vm139, %v1186, 0.0
    %1195 = vadd.xlane.f32.xlu0 %v1194
    %v1196 = vpop.xlane.xlu0 %1195
    %v1197 = vsel %vm139, %v1187, 0.0
    %1198 = vadd.xlane.f32.xlu0 %v1197
    %v1199 = vpop.xlane.xlu0 %1198
    %v1200 = vmul.f32 %v1190, %v158
    %v1201 = vmul.f32 %v1193, %v158
    %v1202 = vmul.f32 %v1196, %v158
    %v1203 = vmul.f32 %v1199, %v158
    %v1204 = vadd.f32 %v1200, 1e-05
    %v1205 = vadd.f32 %v1201, 1e-05
    %v1206 = vadd.f32 %v1202, 1e-05
    %v1207 = vadd.f32 %v1203, 1e-05
    %v1208 = vrsqrt.pop %v1204
    %v1209 = vmul.f32 %v1208, %v1204
    %v1210 = vmul.f32 %v1209, %v1208
    %v1211 = vmul.f32 0.5, %v1210
    %v1212 = vsub.f32 1.5, %v1211
    %v1213 = vmul.f32 %v1208, %v1212
    %vm1214 = vweird.f32 %v1204
    %vm1215 = vweird.f32 %v1208
    %vm1216 = vmor %vm1214, %vm1215
    %v1217 = vsel %vm1216, %v1208, %v1213
    %v1218 = vrsqrt.pop %v1205
    %v1219 = vmul.f32 %v1218, %v1205
    %v1220 = vmul.f32 %v1219, %v1218
    %v1221 = vmul.f32 0.5, %v1220
    %v1222 = vsub.f32 1.5, %v1221
    %v1223 = vmul.f32 %v1218, %v1222
    %vm1224 = vweird.f32 %v1205
    %vm1225 = vweird.f32 %v1218
    %vm1226 = vmor %vm1224, %vm1225
    %v1227 = vsel %vm1226, %v1218, %v1223
    %v1228 = vrsqrt.pop %v1206
    %v1229 = vmul.f32 %v1228, %v1206
    %v1230 = vmul.f32 %v1229, %v1228
    %v1231 = vmul.f32 0.5, %v1230
    %v1232 = vsub.f32 1.5, %v1231
    %v1233 = vmul.f32 %v1228, %v1232
    %vm1234 = vweird.f32 %v1206
    %vm1235 = vweird.f32 %v1228
    %vm1236 = vmor %vm1234, %vm1235
    %v1237 = vsel %vm1236, %v1228, %v1233
    %v1238 = vrsqrt.pop %v1207
    %v1239 = vmul.f32 %v1238, %v1207
    %v1240 = vmul.f32 %v1239, %v1238
    %v1241 = vmul.f32 0.5, %v1240
    %v1242 = vsub.f32 1.5, %v1241
    %v1243 = vmul.f32 %v1238, %v1242
    %vm1244 = vweird.f32 %v1207
    %vm1245 = vweird.f32 %v1238
    %vm1246 = vmor %vm1244, %vm1245
    %v1247 = vsel %vm1246, %v1238, %v1243
    %v1248 = vmul.f32 %v1180, %v1217
    %v1249 = vmul.f32 %v1181, %v1227
    %v1250 = vmul.f32 %v1182, %v1237
    %v1251 = vmul.f32 %v1183, %v1247
    %v1252 = vperm.slane %v57, 5
    %v1253 = vmul.f32 %v1248, %v1252
    %v1254 = vmul.f32 %v1249, %v1252
    %v1255 = vmul.f32 %v1250, %v1252
    %v1256 = vmul.f32 %v1251, %v1252
    %v1257 = vperm.slane %v57, 6
    %v1258 = vadd.f32 %v1253, %v1257
    %v1259 = vadd.f32 %v1254, %v1257
    %v1260 = vadd.f32 %v1255, %v1257
    %v1261 = vadd.f32 %v1256, %v1257
    %v1262 = vperm.slane %v57, 7
    %v1264 = vsel %vm139, %v1258, 0
    %v1267 = vsel %vm139, %v1259, 0
    %v1270 = vsel %vm139, %v1260, 0
    %v1273 = vsel %vm139, %v1261, 0
    %1275 = vmatpush.msra.mxu0 0.0
    %1276 = vmatpush.msra.mxu0 0.0
    %1277 = vmatpush.msra.mxu0 0.0
    %1278 = vmatpush.msra.mxu0 0.0
    %1279 = vmatpush.msra.mxu0 0.0
    %1280 = vmatpush.msra.mxu0 0.0
    %1281 = vmatpush.msra.mxu0 0.0
    %1282 = vmatpush.msra.mxu0 0.0
    %1283 = vmatpush.msra.mxu0 0.0
    %1284 = vmatpush.msra.mxu0 0.0
    %1285 = vmatpush.msra.mxu0 0.0
    %1286 = vmatpush.msra.mxu0 0.0
    %1287 = vmatpush.msra.mxu0 %v130
    %1288 = vmatpush.msra.mxu0 %v129
    %1289 = vmatpush.msra.mxu0 %v128
    %1290 = vmatpush.msra.mxu0 %v127
    %1291 = vmatmul.f32.gmra.mxu0 %v1264
    %v1292 = vpop.f32.mrf.mxu0
    %v1293 = vadd.f32 %v1262, %v1292
    %1294 = vmatmul.f32.gmra.mxu0 %v1267
    %v1295 = vpop.f32.mrf.mxu0
    %v1296 = vadd.f32 %v1262, %v1295
    %1297 = vmatmul.f32.gmra.mxu0 %v1270
    %v1298 = vpop.f32.mrf.mxu0
    %v1299 = vadd.f32 %v1262, %v1298
    %1300 = vmatmul.f32.gmra.mxu0 %v1273
    %v1301 = vpop.f32.mrf.mxu0
    %v1302 = vadd.f32 %v1262, %v1301
    %1303 = vdwg.mxu0
    %v1304 = vmul.f32 %v1293, %v1293
    %v1305 = vmul.f32 %v1296, %v1296
    %v1306 = vmul.f32 %v1299, %v1299
    %v1307 = vmul.f32 %v1302, %v1302
    %v1308 = vmul.f32 %v1293, %v1304
    %v1309 = vmul.f32 %v1296, %v1305
    %v1310 = vmul.f32 %v1299, %v1306
    %v1311 = vmul.f32 %v1302, %v1307
    %v1312 = vmul.f32 %v1308, 0.044715
    %v1313 = vmul.f32 %v1309, 0.044715
    %v1314 = vmul.f32 %v1310, 0.044715
    %v1315 = vmul.f32 %v1311, 0.044715
    %v1316 = vadd.f32 %v1293, %v1312
    %v1317 = vadd.f32 %v1296, %v1313
    %v1318 = vadd.f32 %v1299, %v1314
    %v1319 = vadd.f32 %v1302, %v1315
    %v1320 = vmul.f32 %v1316, 0.7978846
    %v1321 = vmul.f32 %v1317, 0.7978846
    %v1322 = vmul.f32 %v1318, 0.7978846
    %v1323 = vmul.f32 %v1319, 0.7978846
    %v1324 = vtanh.pop %v1320
    %v1325 = vtanh.pop %v1321
    %v1326 = vtanh.pop %v1322
    %v1327 = vtanh.pop %v1323
    %v1328 = vadd.f32 %v1324, 1.0
    %v1329 = vadd.f32 %v1325, 1.0
    %v1330 = vadd.f32 %v1326, 1.0
    %v1331 = vadd.f32 %v1327, 1.0
    %v1332 = vmul.f32 %v1328, 0.5
    %v1333 = vmul.f32 %v1329, 0.5
    %v1334 = vmul.f32 %v1330, 0.5
    %v1335 = vmul.f32 %v1331, 0.5
    %v1336 = vmul.f32 %v1293, %v1332
    %v1337 = vmul.f32 %v1296, %v1333
    %v1338 = vmul.f32 %v1299, %v1334
    %v1339 = vmul.f32 %v1302, %v1335
    %vm1340 = vcmask 523264
    %v1342 = vsel %vm1340, %v1336, 0
    %v1345 = vsel %vm1340, %v1337, 0
    %v1348 = vsel %vm1340, %v1338, 0
    %v1351 = vsel %vm1340, %v1339, 0
    %1353 = vmatpush.msra.mxu0 0.0
    %1354 = vmatpush.msra.mxu0 0.0
    %1355 = vmatpush.msra.mxu0 0.0
    %1356 = vmatpush.msra.mxu0 0.0
    %1357 = vmatpush.msra.mxu0 0.0
    %1358 = vmatpush.msra.mxu0 0.0
    %1359 = vmatpush.msra.mxu0 0.0
    %1360 = vmatpush.msra.mxu0 0.0
    %1361 = vmatpush.msra.mxu0 %v138
    %1362 = vmatpush.msra.mxu0 %v137
    %1363 = vmatpush.msra.mxu0 %v136
    %1364 = vmatpush.msra.mxu0 %v135
    %1365 = vmatpush.msra.mxu0 %v134
    %1366 = vmatpush.msra.mxu0 %v133
    %1367 = vmatpush.msra.mxu0 %v132
    %1368 = vmatpush.msra.mxu0 %v131
    %1369 = vmatmul.f32.gmra.mxu0 %v1342
    %v1370 = vpop.f32.mrf.mxu0
    %v1371 = vadd.f32 0.0, %v1370
    %1372 = vmatmul.f32.gmra.mxu0 %v1345
    %v1373 = vpop.f32.mrf.mxu0
    %v1374 = vadd.f32 0.0, %v1373
    %1375 = vmatmul.f32.gmra.mxu0 %v1348
    %v1376 = vpop.f32.mrf.mxu0
    %v1377 = vadd.f32 0.0, %v1376
    %1378 = vmatmul.f32.gmra.mxu0 %v1351
    %v1379 = vpop.f32.mrf.mxu0
    %v1380 = vadd.f32 0.0, %v1379
    %1381 = vdwg.mxu0
    %v1382 = vadd.f32 %v1160, %v1371
    %v1383 = vadd.f32 %v1161, %v1374
    %v1384 = vadd.f32 %v1162, %v1377
    %v1385 = vadd.f32 %v1163, %v1380
    %v1386 = vperm.slane %v58, 0
    %v1387 = vadd.f32 %v1382, %v1386
    %v1388 = vadd.f32 %v1383, %v1386
    %v1389 = vadd.f32 %v1384, %v1386
    %v1390 = vadd.f32 %v1385, %v1386
    %v1391 = vsel %vm139, %v1387, 0.0
    %v1392 = vsel %vm139, %v1388, 0.0
    %v1393 = vadd.f32 %v1391, %v1392
    %v1394 = vrot.slane %v1393, 4
    %v1395 = vadd.f32 %v1393, %v1394
    %v1396 = vrot.slane %v1395, 2
    %v1397 = vadd.f32 %v1395, %v1396
    %v1398 = vrot.slane %v1397, 1
    %v1399 = vadd.f32 %v1397, %v1398
    %v1400 = vsel %vm139, %v1389, 0.0
    %v1401 = vsel %vm139, %v1390, 0.0
    %v1402 = vadd.f32 %v1400, %v1401
    %v1403 = vrot.slane %v1402, 4
    %v1404 = vadd.f32 %v1402, %v1403
    %v1405 = vrot.slane %v1404, 2
    %v1406 = vadd.f32 %v1404, %v1405
    %v1407 = vrot.slane %v1406, 1
    %v1408 = vadd.f32 %v1406, %v1407
    %v1409 = vrcp.pop 16.0
    %v1410 = vmul.f32 16.0, %v1409
    %v1411 = vsub.f32 1.0, %v1410
    %v1412 = vmul.f32 %v1409, %v1411
    %v1413 = vadd.f32 %v1409, %v1412
    %vm1414 = vweird.f32 %v1409
    %v1415 = vsel %vm1414, %v1409, %v1413
    %v1416 = vmul.f32 %v1399, %v1415
    %v1417 = vmul.f32 %v1408, %v1415
    %v1418 = vld [vmem:[%s9] sm:$0xff]
    %v1419 = vld [vmem:[%s9 + $0x8] sm:$0xff]
    %v1420 = vld [vmem:[%s9 + $0x10] sm:$0xff]
    %v1421 = vld [vmem:[%s9 + $0x18] sm:$0xff]
    %v1422 = vperm.slane %v58, 1
    %vm1425 = vcmask 1041409
    %v1426 = vsel %vm1425, %v1417, %v1416
    %v1427 = vsel %vm139, %v1426, 0
    %1429 = vmatpush.msra.mxu0 0.0
    %1430 = vmatpush.msra.mxu0 0.0
    %1431 = vmatpush.msra.mxu0 0.0
    %1432 = vmatpush.msra.mxu0 0.0
    %1433 = vmatpush.msra.mxu0 0.0
    %1434 = vmatpush.msra.mxu0 0.0
    %1435 = vmatpush.msra.mxu0 0.0
    %1436 = vmatpush.msra.mxu0 0.0
    %1437 = vmatpush.msra.mxu0 0.0
    %1438 = vmatpush.msra.mxu0 0.0
    %1439 = vmatpush.msra.mxu0 0.0
    %1440 = vmatpush.msra.mxu0 0.0
    %1441 = vmatpush.msra.mxu0 %v1421
    %1442 = vmatpush.msra.mxu0 %v1420
    %1443 = vmatpush.msra.mxu0 %v1419
    %1444 = vmatpush.msra.mxu0 %v1418
    %1445 = vmatmul.f32.gmra.mxu0 %v1427
    %v1446 = vpop.f32.mrf.mxu0
    %v1447 = vadd.f32 %v1422, %v1446
    %1448 = vdwg.mxu0
    %v1449 = vmul.f32 %v1447, %v1447
    %vm1450 = vcmask 254976
    %v1451 = vsel %vm1450, %v1449, 0.0
    %1452 = vadd.xlane.f32.xlu0 %v1451
    %v1453 = vpop.xlane.xlu0 %1452
    %v1454 = vmax.f32 %v1453, 1e-24
    %v1455 = vrsqrt.pop %v1454
    %v1456 = vmul.f32 %v1455, %v1454
    %v1457 = vmul.f32 %v1456, %v1455
    %v1458 = vmul.f32 0.5, %v1457
    %v1459 = vsub.f32 1.5, %v1458
    %v1460 = vmul.f32 %v1455, %v1459
    %vm1461 = vweird.f32 %v1454
    %vm1462 = vweird.f32 %v1455
    %vm1463 = vmor %vm1461, %vm1462
    %v1464 = vsel %vm1463, %v1455, %v1460
    %v1465 = vmul.f32 %v1447, %v1464
    %1466 = vst.msk [vmem:[#allocation2] sm:$0x3] %vm1450, %v1465
    %v1467 = vld [vmem:[%s2] sm:$0xff]
    %v1468 = vld [vmem:[%s2 + $0x8] sm:$0xff]
    %v1469 = vld [vmem:[%s3] sm:$0x1]
    %v1470 = vld [vmem:[%s3 + $0x1] sm:$0x1]
    %v1471 = vld [vmem:[%s10] sm:$0xff]
    %v1472 = vld [vmem:[%s10 + $0x8] sm:$0xff]
    %v1473 = vld [vmem:[%s10 + $0x10] sm:$0xff]
    %v1474 = vld [vmem:[%s10 + $0x18] sm:$0xff]
    %v1475 = vld [vmem:[%s11] sm:$0xff]
    %v1476 = vld [vmem:[%s11 + $0x8] sm:$0xff]
    %v1477 = vld [vmem:[%s11 + $0x10] sm:$0xff]
    %v1478 = vld [vmem:[%s11 + $0x18] sm:$0xff]
    %v1479 = vld [vmem:[%s12] sm:$0xff]
    %v1480 = vld [vmem:[%s12 + $0x8] sm:$0xff]
    %v1481 = vld [vmem:[%s12 + $0x10] sm:$0xff]
    %v1482 = vld [vmem:[%s12 + $0x18] sm:$0xff]
    %v1483 = vld [vmem:[%s13] sm:$0xff]
    %v1484 = vld [vmem:[%s13 + $0x8] sm:$0xff]
    %v1485 = vld [vmem:[%s13 + $0x10] sm:$0xff]
    %v1486 = vld [vmem:[%s13 + $0x18] sm:$0xff]
    %v1487 = vld [vmem:[%s13 + $0x20] sm:$0xff]
    %v1488 = vld [vmem:[%s13 + $0x28] sm:$0xff]
    %v1489 = vld [vmem:[%s13 + $0x30] sm:$0xff]
    %v1490 = vld [vmem:[%s13 + $0x38] sm:$0xff]
    %v1491 = vsel %vm139, %v1467, 0.0
    %1492 = vadd.xlane.f32.xlu0 %v1491
    %v1493 = vpop.xlane.xlu0 %1492
    %v1494 = vsel %vm139, %v1468, 0.0
    %1495 = vadd.xlane.f32.xlu0 %v1494
    %v1496 = vpop.xlane.xlu0 %1495
    %v1497 = vmul.f32 %v1493, %v158
    %v1498 = vmul.f32 %v1496, %v158
    %v1499 = vsub.f32 %v1467, %v1497
    %v1500 = vsub.f32 %v1468, %v1498
    %v1501 = vmul.f32 %v1499, %v1499
    %v1502 = vmul.f32 %v1500, %v1500
    %v1503 = vsel %vm139, %v1501, 0.0
    %1504 = vadd.xlane.f32.xlu0 %v1503
    %v1505 = vpop.xlane.xlu0 %1504
    %v1506 = vsel %vm139, %v1502, 0.0
    %1507 = vadd.xlane.f32.xlu0 %v1506
    %v1508 = vpop.xlane.xlu0 %1507
    %v1509 = vmul.f32 %v1505, %v158
    %v1510 = vmul.f32 %v1508, %v158
    %v1511 = vadd.f32 %v1509, 1e-05
    %v1512 = vadd.f32 %v1510, 1e-05
    %v1513 = vrsqrt.pop %v1511
    %v1514 = vmul.f32 %v1513, %v1511
    %v1515 = vmul.f32 %v1514, %v1513
    %v1516 = vmul.f32 0.5, %v1515
    %v1517 = vsub.f32 1.5, %v1516
    %v1518 = vmul.f32 %v1513, %v1517
    %vm1519 = vweird.f32 %v1511
    %vm1520 = vweird.f32 %v1513
    %vm1521 = vmor %vm1519, %vm1520
    %v1522 = vsel %vm1521, %v1513, %v1518
    %v1523 = vrsqrt.pop %v1512
    %v1524 = vmul.f32 %v1523, %v1512
    %v1525 = vmul.f32 %v1524, %v1523
    %v1526 = vmul.f32 0.5, %v1525
    %v1527 = vsub.f32 1.5, %v1526
    %v1528 = vmul.f32 %v1523, %v1527
    %vm1529 = vweird.f32 %v1512
    %vm1530 = vweird.f32 %v1523
    %vm1531 = vmor %vm1529, %vm1530
    %v1532 = vsel %vm1531, %v1523, %v1528
    %v1533 = vmul.f32 %v1499, %v1522
    %v1534 = vmul.f32 %v1500, %v1532
    %v1535 = vperm.slane %v58, 2
    %v1536 = vmul.f32 %v1533, %v1535
    %v1537 = vmul.f32 %v1534, %v1535
    %v1538 = vperm.slane %v58, 3
    %v1539 = vadd.f32 %v1536, %v1538
    %v1540 = vadd.f32 %v1537, %v1538
    %v1541 = vperm.slane %v58, 4
    %v1543 = vsel %vm139, %v1539, 0
    %v1546 = vsel %vm139, %v1540, 0
    %1548 = vmatpush.msra.mxu0 0.0
    %1549 = vmatpush.msra.mxu0 0.0
    %1550 = vmatpush.msra.mxu0 0.0
    %1551 = vmatpush.msra.mxu0 0.0
    %1552 = vmatpush.msra.mxu0 0.0
    %1553 = vmatpush.msra.mxu0 0.0
    %1554 = vmatpush.msra.mxu0 0.0
    %1555 = vmatpush.msra.mxu0 0.0
    %1556 = vmatpush.msra.mxu0 0.0
    %1557 = vmatpush.msra.mxu0 0.0
    %1558 = vmatpush.msra.mxu0 0.0
    %1559 = vmatpush.msra.mxu0 0.0
    %1560 = vmatpush.msra.mxu0 %v1474
    %1561 = vmatpush.msra.mxu0 %v1473
    %1562 = vmatpush.msra.mxu0 %v1472
    %1563 = vmatpush.msra.mxu0 %v1471
    %1564 = vmatmul.f32.gmra.mxu0 %v1543
    %v1565 = vpop.f32.mrf.mxu0
    %v1566 = vadd.f32 %v1541, %v1565
    %1567 = vmatmul.f32.gmra.mxu0 %v1546
    %v1568 = vpop.f32.mrf.mxu0
    %v1569 = vadd.f32 %v1541, %v1568
    %1570 = vdwg.mxu0
    %1573 = vrot.lane.b32.xlu0 %v1566, 120
    %v1574 = vpop.permute.xlu0 %1573
    %1575 = vrot.lane.b32.xlu0 %v1569, 120
    %v1576 = vpop.permute.xlu0 %1575
    %1577 = vrot.lane.b32.xlu0 %v1566, 112
    %v1578 = vpop.permute.xlu0 %1577
    %1579 = vrot.lane.b32.xlu0 %v1569, 112
    %v1580 = vpop.permute.xlu0 %1579
    %1581 = vrot.lane.b32.xlu0 %v1566, 104
    %v1582 = vpop.permute.xlu0 %1581
    %1583 = vrot.lane.b32.xlu0 %v1569, 104
    %v1584 = vpop.permute.xlu0 %1583
    %v1587 = vperm.slane %v1469, 0
    %v1588 = vperm.slane %v1470, 0
    %1591 = vrot.lane.b32.xlu0 %v1566, 96
    %v1592 = vpop.permute.xlu0 %1591
    %v1593 = vsel %vm319, %v1566, 0
    %v1595 = vsel %vm319, %v1592, 0
    %1597 = vmatpush.xpose.msra.mxu0 0.0
    %1598 = vmatpush.xpose.msra.mxu0 0.0
    %1599 = vmatpush.xpose.msra.mxu0 0.0
    %1600 = vmatpush.xpose.msra.mxu0 0.0
    %1601 = vmatpush.xpose.msra.mxu0 0.0
    %1602 = vmatpush.xpose.msra.mxu0 0.0
    %1603 = vmatpush.xpose.msra.mxu0 0.0
    %1604 = vmatpush.xpose.msra.mxu0 0.0
    %1605 = vmatpush.xpose.msra.mxu0 0.0
    %1606 = vmatpush.xpose.msra.mxu0 0.0
    %1607 = vmatpush.xpose.msra.mxu0 0.0
    %1608 = vmatpush.xpose.msra.mxu0 0.0
    %1609 = vmatpush.xpose.msra.mxu0 0.0
    %1610 = vmatpush.xpose.msra.mxu0 0.0
    %1611 = vmatpush.xpose.msra.mxu0 0.0
    %1612 = vmatpush.xpose.msra.mxu0 %v1595
    %1613 = vmatmul.f32.gmra.mxu0 %v1593
    %v1614 = vpop.f32.mrf.mxu0
    %v1615 = vadd.f32 %v1587, %v1614
    %1616 = vdwg.mxu0
    %1617 = vrot.lane.b32.xlu0 %v1569, 96
    %v1618 = vpop.permute.xlu0 %1617
    %v1619 = vsel %vm319, %v1569, 0
    %v1621 = vsel %vm319, %v1618, 0
    %1623 = vmatpush.xpose.msra.mxu0 0.0
    %1624 = vmatpush.xpose.msra.mxu0 0.0
    %1625 = vmatpush.xpose.msra.mxu0 0.0
    %1626 = vmatpush.xpose.msra.mxu0 0.0
    %1627 = vmatpush.xpose.msra.mxu0 0.0
    %1628 = vmatpush.xpose.msra.mxu0 0.0
    %1629 = vmatpush.xpose.msra.mxu0 0.0
    %1630 = vmatpush.xpose.msra.mxu0 0.0
    %1631 = vmatpush.xpose.msra.mxu0 0.0
    %1632 = vmatpush.xpose.msra.mxu0 0.0
    %1633 = vmatpush.xpose.msra.mxu0 0.0
    %1634 = vmatpush.xpose.msra.mxu0 0.0
    %1635 = vmatpush.xpose.msra.mxu0 0.0
    %1636 = vmatpush.xpose.msra.mxu0 0.0
    %1637 = vmatpush.xpose.msra.mxu0 0.0
    %1638 = vmatpush.xpose.msra.mxu0 %v1621
    %1639 = vmatmul.f32.gmra.mxu0 %v1619
    %v1640 = vpop.f32.mrf.mxu0
    %v1641 = vadd.f32 %v1588, %v1640
    %1642 = vdwg.mxu0
    %1643 = vrot.lane.b32.xlu0 %v1574, 96
    %v1644 = vpop.permute.xlu0 %1643
    %v1645 = vsel %vm319, %v1574, 0
    %v1647 = vsel %vm319, %v1644, 0
    %1649 = vmatpush.xpose.msra.mxu0 0.0
    %1650 = vmatpush.xpose.msra.mxu0 0.0
    %1651 = vmatpush.xpose.msra.mxu0 0.0
    %1652 = vmatpush.xpose.msra.mxu0 0.0
    %1653 = vmatpush.xpose.msra.mxu0 0.0
    %1654 = vmatpush.xpose.msra.mxu0 0.0
    %1655 = vmatpush.xpose.msra.mxu0 0.0
    %1656 = vmatpush.xpose.msra.mxu0 0.0
    %1657 = vmatpush.xpose.msra.mxu0 0.0
    %1658 = vmatpush.xpose.msra.mxu0 0.0
    %1659 = vmatpush.xpose.msra.mxu0 0.0
    %1660 = vmatpush.xpose.msra.mxu0 0.0
    %1661 = vmatpush.xpose.msra.mxu0 0.0
    %1662 = vmatpush.xpose.msra.mxu0 0.0
    %1663 = vmatpush.xpose.msra.mxu0 0.0
    %1664 = vmatpush.xpose.msra.mxu0 %v1647
    %1665 = vmatmul.f32.gmra.mxu0 %v1645
    %v1666 = vpop.f32.mrf.mxu0
    %v1667 = vadd.f32 %v1587, %v1666
    %1668 = vdwg.mxu0
    %1669 = vrot.lane.b32.xlu0 %v1576, 96
    %v1670 = vpop.permute.xlu0 %1669
    %v1671 = vsel %vm319, %v1576, 0
    %v1673 = vsel %vm319, %v1670, 0
    %1675 = vmatpush.xpose.msra.mxu0 0.0
    %1676 = vmatpush.xpose.msra.mxu0 0.0
    %1677 = vmatpush.xpose.msra.mxu0 0.0
    %1678 = vmatpush.xpose.msra.mxu0 0.0
    %1679 = vmatpush.xpose.msra.mxu0 0.0
    %1680 = vmatpush.xpose.msra.mxu0 0.0
    %1681 = vmatpush.xpose.msra.mxu0 0.0
    %1682 = vmatpush.xpose.msra.mxu0 0.0
    %1683 = vmatpush.xpose.msra.mxu0 0.0
    %1684 = vmatpush.xpose.msra.mxu0 0.0
    %1685 = vmatpush.xpose.msra.mxu0 0.0
    %1686 = vmatpush.xpose.msra.mxu0 0.0
    %1687 = vmatpush.xpose.msra.mxu0 0.0
    %1688 = vmatpush.xpose.msra.mxu0 0.0
    %1689 = vmatpush.xpose.msra.mxu0 0.0
    %1690 = vmatpush.xpose.msra.mxu0 %v1673
    %1691 = vmatmul.f32.gmra.mxu0 %v1671
    %v1692 = vpop.f32.mrf.mxu0
    %v1693 = vadd.f32 %v1588, %v1692
    %1694 = vdwg.mxu0
    %1695 = vrot.lane.b32.xlu0 %v1578, 96
    %v1696 = vpop.permute.xlu0 %1695
    %v1697 = vsel %vm319, %v1578, 0
    %v1699 = vsel %vm319, %v1696, 0
    %1701 = vmatpush.xpose.msra.mxu0 0.0
    %1702 = vmatpush.xpose.msra.mxu0 0.0
    %1703 = vmatpush.xpose.msra.mxu0 0.0
    %1704 = vmatpush.xpose.msra.mxu0 0.0
    %1705 = vmatpush.xpose.msra.mxu0 0.0
    %1706 = vmatpush.xpose.msra.mxu0 0.0
    %1707 = vmatpush.xpose.msra.mxu0 0.0
    %1708 = vmatpush.xpose.msra.mxu0 0.0
    %1709 = vmatpush.xpose.msra.mxu0 0.0
    %1710 = vmatpush.xpose.msra.mxu0 0.0
    %1711 = vmatpush.xpose.msra.mxu0 0.0
    %1712 = vmatpush.xpose.msra.mxu0 0.0
    %1713 = vmatpush.xpose.msra.mxu0 0.0
    %1714 = vmatpush.xpose.msra.mxu0 0.0
    %1715 = vmatpush.xpose.msra.mxu0 0.0
    %1716 = vmatpush.xpose.msra.mxu0 %v1699
    %1717 = vmatmul.f32.gmra.mxu0 %v1697
    %v1718 = vpop.f32.mrf.mxu0
    %v1719 = vadd.f32 %v1587, %v1718
    %1720 = vdwg.mxu0
    %1721 = vrot.lane.b32.xlu0 %v1580, 96
    %v1722 = vpop.permute.xlu0 %1721
    %v1723 = vsel %vm319, %v1580, 0
    %v1725 = vsel %vm319, %v1722, 0
    %1727 = vmatpush.xpose.msra.mxu0 0.0
    %1728 = vmatpush.xpose.msra.mxu0 0.0
    %1729 = vmatpush.xpose.msra.mxu0 0.0
    %1730 = vmatpush.xpose.msra.mxu0 0.0
    %1731 = vmatpush.xpose.msra.mxu0 0.0
    %1732 = vmatpush.xpose.msra.mxu0 0.0
    %1733 = vmatpush.xpose.msra.mxu0 0.0
    %1734 = vmatpush.xpose.msra.mxu0 0.0
    %1735 = vmatpush.xpose.msra.mxu0 0.0
    %1736 = vmatpush.xpose.msra.mxu0 0.0
    %1737 = vmatpush.xpose.msra.mxu0 0.0
    %1738 = vmatpush.xpose.msra.mxu0 0.0
    %1739 = vmatpush.xpose.msra.mxu0 0.0
    %1740 = vmatpush.xpose.msra.mxu0 0.0
    %1741 = vmatpush.xpose.msra.mxu0 0.0
    %1742 = vmatpush.xpose.msra.mxu0 %v1725
    %1743 = vmatmul.f32.gmra.mxu0 %v1723
    %v1744 = vpop.f32.mrf.mxu0
    %v1745 = vadd.f32 %v1588, %v1744
    %1746 = vdwg.mxu0
    %1747 = vrot.lane.b32.xlu0 %v1582, 96
    %v1748 = vpop.permute.xlu0 %1747
    %v1749 = vsel %vm319, %v1582, 0
    %v1751 = vsel %vm319, %v1748, 0
    %1753 = vmatpush.xpose.msra.mxu0 0.0
    %1754 = vmatpush.xpose.msra.mxu0 0.0
    %1755 = vmatpush.xpose.msra.mxu0 0.0
    %1756 = vmatpush.xpose.msra.mxu0 0.0
    %1757 = vmatpush.xpose.msra.mxu0 0.0
    %1758 = vmatpush.xpose.msra.mxu0 0.0
    %1759 = vmatpush.xpose.msra.mxu0 0.0
    %1760 = vmatpush.xpose.msra.mxu0 0.0
    %1761 = vmatpush.xpose.msra.mxu0 0.0
    %1762 = vmatpush.xpose.msra.mxu0 0.0
    %1763 = vmatpush.xpose.msra.mxu0 0.0
    %1764 = vmatpush.xpose.msra.mxu0 0.0
    %1765 = vmatpush.xpose.msra.mxu0 0.0
    %1766 = vmatpush.xpose.msra.mxu0 0.0
    %1767 = vmatpush.xpose.msra.mxu0 0.0
    %1768 = vmatpush.xpose.msra.mxu0 %v1751
    %1769 = vmatmul.f32.gmra.mxu0 %v1749
    %v1770 = vpop.f32.mrf.mxu0
    %v1771 = vadd.f32 %v1587, %v1770
    %1772 = vdwg.mxu0
    %1773 = vrot.lane.b32.xlu0 %v1584, 96
    %v1774 = vpop.permute.xlu0 %1773
    %v1775 = vsel %vm319, %v1584, 0
    %v1777 = vsel %vm319, %v1774, 0
    %1779 = vmatpush.xpose.msra.mxu0 0.0
    %1780 = vmatpush.xpose.msra.mxu0 0.0
    %1781 = vmatpush.xpose.msra.mxu0 0.0
    %1782 = vmatpush.xpose.msra.mxu0 0.0
    %1783 = vmatpush.xpose.msra.mxu0 0.0
    %1784 = vmatpush.xpose.msra.mxu0 0.0
    %1785 = vmatpush.xpose.msra.mxu0 0.0
    %1786 = vmatpush.xpose.msra.mxu0 0.0
    %1787 = vmatpush.xpose.msra.mxu0 0.0
    %1788 = vmatpush.xpose.msra.mxu0 0.0
    %1789 = vmatpush.xpose.msra.mxu0 0.0
    %1790 = vmatpush.xpose.msra.mxu0 0.0
    %1791 = vmatpush.xpose.msra.mxu0 0.0
    %1792 = vmatpush.xpose.msra.mxu0 0.0
    %1793 = vmatpush.xpose.msra.mxu0 0.0
    %1794 = vmatpush.xpose.msra.mxu0 %v1777
    %1795 = vmatmul.f32.gmra.mxu0 %v1775
    %v1796 = vpop.f32.mrf.mxu0
    %v1797 = vadd.f32 %v1588, %v1796
    %1798 = vdwg.mxu0
    %v1799 = vsel %vm319, %v1615, -inf
    %1800 = vmax.xlane.f32.xlu0 %v1799
    %v1801 = vpop.xlane.xlu0 %1800
    %v1802 = vsel %vm319, %v1641, -inf
    %1803 = vmax.xlane.f32.xlu0 %v1802
    %v1804 = vpop.xlane.xlu0 %1803
    %v1805 = vsel %vm319, %v1667, -inf
    %1806 = vmax.xlane.f32.xlu0 %v1805
    %v1807 = vpop.xlane.xlu0 %1806
    %v1808 = vsel %vm319, %v1693, -inf
    %1809 = vmax.xlane.f32.xlu0 %v1808
    %v1810 = vpop.xlane.xlu0 %1809
    %v1811 = vsel %vm319, %v1719, -inf
    %1812 = vmax.xlane.f32.xlu0 %v1811
    %v1813 = vpop.xlane.xlu0 %1812
    %v1814 = vsel %vm319, %v1745, -inf
    %1815 = vmax.xlane.f32.xlu0 %v1814
    %v1816 = vpop.xlane.xlu0 %1815
    %v1817 = vsel %vm319, %v1771, -inf
    %1818 = vmax.xlane.f32.xlu0 %v1817
    %v1819 = vpop.xlane.xlu0 %1818
    %v1820 = vsel %vm319, %v1797, -inf
    %1821 = vmax.xlane.f32.xlu0 %v1820
    %v1822 = vpop.xlane.xlu0 %1821
    %v1823 = vsub.f32 %v1615, %v1801
    %v1824 = vsub.f32 %v1641, %v1804
    %v1825 = vsub.f32 %v1667, %v1807
    %v1826 = vsub.f32 %v1693, %v1810
    %v1827 = vsub.f32 %v1719, %v1813
    %v1828 = vsub.f32 %v1745, %v1816
    %v1829 = vsub.f32 %v1771, %v1819
    %v1830 = vsub.f32 %v1797, %v1822
    %v1831 = vmul.f32 %v1823, 1.442695
    %v1832 = vpow.pop %v1831
    %v1833 = vmul.f32 %v1824, 1.442695
    %v1834 = vpow.pop %v1833
    %v1835 = vmul.f32 %v1825, 1.442695
    %v1836 = vpow.pop %v1835
    %v1837 = vmul.f32 %v1826, 1.442695
    %v1838 = vpow.pop %v1837
    %v1839 = vmul.f32 %v1827, 1.442695
    %v1840 = vpow.pop %v1839
    %v1841 = vmul.f32 %v1828, 1.442695
    %v1842 = vpow.pop %v1841
    %v1843 = vmul.f32 %v1829, 1.442695
    %v1844 = vpow.pop %v1843
    %v1845 = vmul.f32 %v1830, 1.442695
    %v1846 = vpow.pop %v1845
    %v1847 = vsel %vm319, %v1832, 0.0
    %1848 = vadd.xlane.f32.xlu0 %v1847
    %v1849 = vpop.xlane.xlu0 %1848
    %v1850 = vsel %vm319, %v1834, 0.0
    %1851 = vadd.xlane.f32.xlu0 %v1850
    %v1852 = vpop.xlane.xlu0 %1851
    %v1853 = vsel %vm319, %v1836, 0.0
    %1854 = vadd.xlane.f32.xlu0 %v1853
    %v1855 = vpop.xlane.xlu0 %1854
    %v1856 = vsel %vm319, %v1838, 0.0
    %1857 = vadd.xlane.f32.xlu0 %v1856
    %v1858 = vpop.xlane.xlu0 %1857
    %v1859 = vsel %vm319, %v1840, 0.0
    %1860 = vadd.xlane.f32.xlu0 %v1859
    %v1861 = vpop.xlane.xlu0 %1860
    %v1862 = vsel %vm319, %v1842, 0.0
    %1863 = vadd.xlane.f32.xlu0 %v1862
    %v1864 = vpop.xlane.xlu0 %1863
    %v1865 = vsel %vm319, %v1844, 0.0
    %1866 = vadd.xlane.f32.xlu0 %v1865
    %v1867 = vpop.xlane.xlu0 %1866
    %v1868 = vsel %vm319, %v1846, 0.0
    %1869 = vadd.xlane.f32.xlu0 %v1868
    %v1870 = vpop.xlane.xlu0 %1869
    %v1871 = vrcp.pop %v1849
    %v1872 = vrcp.pop %v1852
    %v1873 = vrcp.pop %v1855
    %v1874 = vrcp.pop %v1858
    %v1875 = vrcp.pop %v1861
    %v1876 = vrcp.pop %v1864
    %v1877 = vrcp.pop %v1867
    %v1878 = vrcp.pop %v1870
    %v1879 = vmul.f32 %v1832, %v1871
    %v1880 = vmul.f32 %v1834, %v1872
    %v1881 = vmul.f32 %v1836, %v1873
    %v1882 = vmul.f32 %v1838, %v1874
    %v1883 = vmul.f32 %v1840, %v1875
    %v1884 = vmul.f32 %v1842, %v1876
    %v1885 = vmul.f32 %v1844, %v1877
    %v1886 = vmul.f32 %v1846, %v1878
    %1887 = vrot.lane.b32.xlu0 %v1566, 64
    %v1888 = vpop.permute.xlu0 %1887
    %v1891 = vsel %vm319, %v1879, 0
    %1893 = vmatpush.msra.mxu0 0.0
    %1894 = vmatpush.msra.mxu0 0.0
    %1895 = vmatpush.msra.mxu0 0.0
    %1896 = vmatpush.msra.mxu0 0.0
    %1897 = vmatpush.msra.mxu0 0.0
    %1898 = vmatpush.msra.mxu0 0.0
    %1899 = vmatpush.msra.mxu0 0.0
    %1900 = vmatpush.msra.mxu0 0.0
    %1901 = vmatpush.msra.mxu0 0.0
    %1902 = vmatpush.msra.mxu0 0.0
    %1903 = vmatpush.msra.mxu0 0.0
    %1904 = vmatpush.msra.mxu0 0.0
    %1905 = vmatpush.msra.mxu0 0.0
    %1906 = vmatpush.msra.mxu0 0.0
    %1907 = vmatpush.msra.mxu0 0.0
    %1908 = vmatpush.msra.mxu0 %v1888
    %1909 = vmatmul.f32.gmra.mxu0 %v1891
    %v1910 = vpop.f32.mrf.mxu0
    %v1911 = vadd.f32 0.0, %v1910
    %1912 = vdwg.mxu0
    %1913 = vrot.lane.b32.xlu0 %v1569, 64
    %v1914 = vpop.permute.xlu0 %1913
    %v1917 = vsel %vm319, %v1880, 0
    %1919 = vmatpush.msra.mxu0 0.0
    %1920 = vmatpush.msra.mxu0 0.0
    %1921 = vmatpush.msra.mxu0 0.0
    %1922 = vmatpush.msra.mxu0 0.0
    %1923 = vmatpush.msra.mxu0 0.0
    %1924 = vmatpush.msra.mxu0 0.0
    %1925 = vmatpush.msra.mxu0 0.0
    %1926 = vmatpush.msra.mxu0 0.0
    %1927 = vmatpush.msra.mxu0 0.0
    %1928 = vmatpush.msra.mxu0 0.0
    %1929 = vmatpush.msra.mxu0 0.0
    %1930 = vmatpush.msra.mxu0 0.0
    %1931 = vmatpush.msra.mxu0 0.0
    %1932 = vmatpush.msra.mxu0 0.0
    %1933 = vmatpush.msra.mxu0 0.0
    %1934 = vmatpush.msra.mxu0 %v1914
    %1935 = vmatmul.f32.gmra.mxu0 %v1917
    %v1936 = vpop.f32.mrf.mxu0
    %v1937 = vadd.f32 0.0, %v1936
    %1938 = vdwg.mxu0
    %1939 = vrot.lane.b32.xlu0 %v1574, 64
    %v1940 = vpop.permute.xlu0 %1939
    %v1943 = vsel %vm319, %v1881, 0
    %1945 = vmatpush.msra.mxu0 0.0
    %1946 = vmatpush.msra.mxu0 0.0
    %1947 = vmatpush.msra.mxu0 0.0
    %1948 = vmatpush.msra.mxu0 0.0
    %1949 = vmatpush.msra.mxu0 0.0
    %1950 = vmatpush.msra.mxu0 0.0
    %1951 = vmatpush.msra.mxu0 0.0
    %1952 = vmatpush.msra.mxu0 0.0
    %1953 = vmatpush.msra.mxu0 0.0
    %1954 = vmatpush.msra.mxu0 0.0
    %1955 = vmatpush.msra.mxu0 0.0
    %1956 = vmatpush.msra.mxu0 0.0
    %1957 = vmatpush.msra.mxu0 0.0
    %1958 = vmatpush.msra.mxu0 0.0
    %1959 = vmatpush.msra.mxu0 0.0
    %1960 = vmatpush.msra.mxu0 %v1940
    %1961 = vmatmul.f32.gmra.mxu0 %v1943
    %v1962 = vpop.f32.mrf.mxu0
    %v1963 = vadd.f32 0.0, %v1962
    %1964 = vdwg.mxu0
    %1965 = vrot.lane.b32.xlu0 %v1576, 64
    %v1966 = vpop.permute.xlu0 %1965
    %v1969 = vsel %vm319, %v1882, 0
    %1971 = vmatpush.msra.mxu0 0.0
    %1972 = vmatpush.msra.mxu0 0.0
    %1973 = vmatpush.msra.mxu0 0.0
    %1974 = vmatpush.msra.mxu0 0.0
    %1975 = vmatpush.msra.mxu0 0.0
    %1976 = vmatpush.msra.mxu0 0.0
    %1977 = vmatpush.msra.mxu0 0.0
    %1978 = vmatpush.msra.mxu0 0.0
    %1979 = vmatpush.msra.mxu0 0.0
    %1980 = vmatpush.msra.mxu0 0.0
    %1981 = vmatpush.msra.mxu0 0.0
    %1982 = vmatpush.msra.mxu0 0.0
    %1983 = vmatpush.msra.mxu0 0.0
    %1984 = vmatpush.msra.mxu0 0.0
    %1985 = vmatpush.msra.mxu0 0.0
    %1986 = vmatpush.msra.mxu0 %v1966
    %1987 = vmatmul.f32.gmra.mxu0 %v1969
    %v1988 = vpop.f32.mrf.mxu0
    %v1989 = vadd.f32 0.0, %v1988
    %1990 = vdwg.mxu0
    %1991 = vrot.lane.b32.xlu0 %v1578, 64
    %v1992 = vpop.permute.xlu0 %1991
    %v1995 = vsel %vm319, %v1883, 0
    %1997 = vmatpush.msra.mxu0 0.0
    %1998 = vmatpush.msra.mxu0 0.0
    %1999 = vmatpush.msra.mxu0 0.0
    %2000 = vmatpush.msra.mxu0 0.0
    %2001 = vmatpush.msra.mxu0 0.0
    %2002 = vmatpush.msra.mxu0 0.0
    %2003 = vmatpush.msra.mxu0 0.0
    %2004 = vmatpush.msra.mxu0 0.0
    %2005 = vmatpush.msra.mxu0 0.0
    %2006 = vmatpush.msra.mxu0 0.0
    %2007 = vmatpush.msra.mxu0 0.0
    %2008 = vmatpush.msra.mxu0 0.0
    %2009 = vmatpush.msra.mxu0 0.0
    %2010 = vmatpush.msra.mxu0 0.0
    %2011 = vmatpush.msra.mxu0 0.0
    %2012 = vmatpush.msra.mxu0 %v1992
    %2013 = vmatmul.f32.gmra.mxu0 %v1995
    %v2014 = vpop.f32.mrf.mxu0
    %v2015 = vadd.f32 0.0, %v2014
    %2016 = vdwg.mxu0
    %2017 = vrot.lane.b32.xlu0 %v1580, 64
    %v2018 = vpop.permute.xlu0 %2017
    %v2021 = vsel %vm319, %v1884, 0
    %2023 = vmatpush.msra.mxu0 0.0
    %2024 = vmatpush.msra.mxu0 0.0
    %2025 = vmatpush.msra.mxu0 0.0
    %2026 = vmatpush.msra.mxu0 0.0
    %2027 = vmatpush.msra.mxu0 0.0
    %2028 = vmatpush.msra.mxu0 0.0
    %2029 = vmatpush.msra.mxu0 0.0
    %2030 = vmatpush.msra.mxu0 0.0
    %2031 = vmatpush.msra.mxu0 0.0
    %2032 = vmatpush.msra.mxu0 0.0
    %2033 = vmatpush.msra.mxu0 0.0
    %2034 = vmatpush.msra.mxu0 0.0
    %2035 = vmatpush.msra.mxu0 0.0
    %2036 = vmatpush.msra.mxu0 0.0
    %2037 = vmatpush.msra.mxu0 0.0
    %2038 = vmatpush.msra.mxu0 %v2018
    %2039 = vmatmul.f32.gmra.mxu0 %v2021
    %v2040 = vpop.f32.mrf.mxu0
    %v2041 = vadd.f32 0.0, %v2040
    %2042 = vdwg.mxu0
    %2043 = vrot.lane.b32.xlu0 %v1582, 64
    %v2044 = vpop.permute.xlu0 %2043
    %v2047 = vsel %vm319, %v1885, 0
    %2049 = vmatpush.msra.mxu0 0.0
    %2050 = vmatpush.msra.mxu0 0.0
    %2051 = vmatpush.msra.mxu0 0.0
    %2052 = vmatpush.msra.mxu0 0.0
    %2053 = vmatpush.msra.mxu0 0.0
    %2054 = vmatpush.msra.mxu0 0.0
    %2055 = vmatpush.msra.mxu0 0.0
    %2056 = vmatpush.msra.mxu0 0.0
    %2057 = vmatpush.msra.mxu0 0.0
    %2058 = vmatpush.msra.mxu0 0.0
    %2059 = vmatpush.msra.mxu0 0.0
    %2060 = vmatpush.msra.mxu0 0.0
    %2061 = vmatpush.msra.mxu0 0.0
    %2062 = vmatpush.msra.mxu0 0.0
    %2063 = vmatpush.msra.mxu0 0.0
    %2064 = vmatpush.msra.mxu0 %v2044
    %2065 = vmatmul.f32.gmra.mxu0 %v2047
    %v2066 = vpop.f32.mrf.mxu0
    %v2067 = vadd.f32 0.0, %v2066
    %2068 = vdwg.mxu0
    %2069 = vrot.lane.b32.xlu0 %v1584, 64
    %v2070 = vpop.permute.xlu0 %2069
    %v2073 = vsel %vm319, %v1886, 0
    %2075 = vmatpush.msra.mxu0 0.0
    %2076 = vmatpush.msra.mxu0 0.0
    %2077 = vmatpush.msra.mxu0 0.0
    %2078 = vmatpush.msra.mxu0 0.0
    %2079 = vmatpush.msra.mxu0 0.0
    %2080 = vmatpush.msra.mxu0 0.0
    %2081 = vmatpush.msra.mxu0 0.0
    %2082 = vmatpush.msra.mxu0 0.0
    %2083 = vmatpush.msra.mxu0 0.0
    %2084 = vmatpush.msra.mxu0 0.0
    %2085 = vmatpush.msra.mxu0 0.0
    %2086 = vmatpush.msra.mxu0 0.0
    %2087 = vmatpush.msra.mxu0 0.0
    %2088 = vmatpush.msra.mxu0 0.0
    %2089 = vmatpush.msra.mxu0 0.0
    %2090 = vmatpush.msra.mxu0 %v2070
    %2091 = vmatmul.f32.gmra.mxu0 %v2073
    %v2092 = vpop.f32.mrf.mxu0
    %v2093 = vadd.f32 0.0, %v2092
    %2094 = vdwg.mxu0
    %2097 = vrot.lane.b32.xlu0 %v1963, 8
    %v2098 = vpop.permute.xlu0 %2097
    %2099 = vrot.lane.b32.xlu0 %v1989, 8
    %v2100 = vpop.permute.xlu0 %2099
    %2105 = vrot.lane.b32.xlu0 %v2015, 16
    %v2106 = vpop.permute.xlu0 %2105
    %2107 = vrot.lane.b32.xlu0 %v2041, 16
    %v2108 = vpop.permute.xlu0 %2107
    %2113 = vrot.lane.b32.xlu0 %v2067, 24
    %v2114 = vpop.permute.xlu0 %2113
    %2115 = vrot.lane.b32.xlu0 %v2093, 24
    %v2116 = vpop.permute.xlu0 %2115
    %v2119 = vsel %vm319, %v1911, %v2098
    %v2120 = vsel %vm319, %v1937, %v2100
    %v2121 = vsel %vm596, %v2119, %v2106
    %v2122 = vsel %vm596, %v2120, %v2108
    %v2123 = vsel %vm1109, %v2121, %v2114
    %v2124 = vsel %vm1109, %v2122, %v2116
    %v2126 = vsel %vm139, %v2123, 0
    %v2129 = vsel %vm139, %v2124, 0
    %2131 = vmatpush.msra.mxu0 0.0
    %2132 = vmatpush.msra.mxu0 0.0
    %2133 = vmatpush.msra.mxu0 0.0
    %2134 = vmatpush.msra.mxu0 0.0
    %2135 = vmatpush.msra.mxu0 0.0
    %2136 = vmatpush.msra.mxu0 0.0
    %2137 = vmatpush.msra.mxu0 0.0
    %2138 = vmatpush.msra.mxu0 0.0
    %2139 = vmatpush.msra.mxu0 0.0
    %2140 = vmatpush.msra.mxu0 0.0
    %2141 = vmatpush.msra.mxu0 0.0
    %2142 = vmatpush.msra.mxu0 0.0
    %2143 = vmatpush.msra.mxu0 %v1478
    %2144 = vmatpush.msra.mxu0 %v1477
    %2145 = vmatpush.msra.mxu0 %v1476
    %2146 = vmatpush.msra.mxu0 %v1475
    %2147 = vmatmul.f32.gmra.mxu0 %v2126
    %v2148 = vpop.f32.mrf.mxu0
    %v2149 = vadd.f32 0.0, %v2148
    %2150 = vmatmul.f32.gmra.mxu0 %v2129
    %v2151 = vpop.f32.mrf.mxu0
    %v2152 = vadd.f32 0.0, %v2151
    %2153 = vdwg.mxu0
    %v2154 = vadd.f32 %v1467, %v2149
    %v2155 = vadd.f32 %v1468, %v2152
    %v2156 = vperm.slane %v58, 5
    %v2157 = vadd.f32 %v2154, %v2156
    %v2158 = vadd.f32 %v2155, %v2156
    %v2159 = vsel %vm139, %v2157, 0.0
    %2160 = vadd.xlane.f32.xlu0 %v2159
    %v2161 = vpop.xlane.xlu0 %2160
    %v2162 = vsel %vm139, %v2158, 0.0
    %2163 = vadd.xlane.f32.xlu0 %v2162
    %v2164 = vpop.xlane.xlu0 %2163
    %v2165 = vmul.f32 %v2161, %v158
    %v2166 = vmul.f32 %v2164, %v158
    %v2167 = vsub.f32 %v2157, %v2165
    %v2168 = vsub.f32 %v2158, %v2166
    %v2169 = vmul.f32 %v2167, %v2167
    %v2170 = vmul.f32 %v2168, %v2168
    %v2171 = vsel %vm139, %v2169, 0.0
    %2172 = vadd.xlane.f32.xlu0 %v2171
    %v2173 = vpop.xlane.xlu0 %2172
    %v2174 = vsel %vm139, %v2170, 0.0
    %2175 = vadd.xlane.f32.xlu0 %v2174
    %v2176 = vpop.xlane.xlu0 %2175
    %v2177 = vmul.f32 %v2173, %v158
    %v2178 = vmul.f32 %v2176, %v158
    %v2179 = vadd.f32 %v2177, 1e-05
    %v2180 = vadd.f32 %v2178, 1e-05
    %v2181 = vrsqrt.pop %v2179
    %v2182 = vmul.f32 %v2181, %v2179
    %v2183 = vmul.f32 %v2182, %v2181
    %v2184 = vmul.f32 0.5, %v2183
    %v2185 = vsub.f32 1.5, %v2184
    %v2186 = vmul.f32 %v2181, %v2185
    %vm2187 = vweird.f32 %v2179
    %vm2188 = vweird.f32 %v2181
    %vm2189 = vmor %vm2187, %vm2188
    %v2190 = vsel %vm2189, %v2181, %v2186
    %v2191 = vrsqrt.pop %v2180
    %v2192 = vmul.f32 %v2191, %v2180
    %v2193 = vmul.f32 %v2192, %v2191
    %v2194 = vmul.f32 0.5, %v2193
    %v2195 = vsub.f32 1.5, %v2194
    %v2196 = vmul.f32 %v2191, %v2195
    %vm2197 = vweird.f32 %v2180
    %vm2198 = vweird.f32 %v2191
    %vm2199 = vmor %vm2197, %vm2198
    %v2200 = vsel %vm2199, %v2191, %v2196
    %v2201 = vmul.f32 %v2167, %v2190
    %v2202 = vmul.f32 %v2168, %v2200
    %v2203 = vperm.slane %v58, 6
    %v2204 = vmul.f32 %v2201, %v2203
    %v2205 = vmul.f32 %v2202, %v2203
    %v2206 = vperm.slane %v58, 7
    %v2207 = vadd.f32 %v2204, %v2206
    %v2208 = vadd.f32 %v2205, %v2206
    %v2209 = vperm.slane %v59, 0
    %v2211 = vsel %vm139, %v2207, 0
    %v2214 = vsel %vm139, %v2208, 0
    %2216 = vmatpush.msra.mxu0 0.0
    %2217 = vmatpush.msra.mxu0 0.0
    %2218 = vmatpush.msra.mxu0 0.0
    %2219 = vmatpush.msra.mxu0 0.0
    %2220 = vmatpush.msra.mxu0 0.0
    %2221 = vmatpush.msra.mxu0 0.0
    %2222 = vmatpush.msra.mxu0 0.0
    %2223 = vmatpush.msra.mxu0 0.0
    %2224 = vmatpush.msra.mxu0 0.0
    %2225 = vmatpush.msra.mxu0 0.0
    %2226 = vmatpush.msra.mxu0 0.0
    %2227 = vmatpush.msra.mxu0 0.0
    %2228 = vmatpush.msra.mxu0 %v1482
    %2229 = vmatpush.msra.mxu0 %v1481
    %2230 = vmatpush.msra.mxu0 %v1480
    %2231 = vmatpush.msra.mxu0 %v1479
    %2232 = vmatmul.f32.gmra.mxu0 %v2211
    %v2233 = vpop.f32.mrf.mxu0
    %v2234 = vadd.f32 %v2209, %v2233
    %2235 = vmatmul.f32.gmra.mxu0 %v2214
    %v2236 = vpop.f32.mrf.mxu0
    %v2237 = vadd.f32 %v2209, %v2236
    %2238 = vdwg.mxu0
    %v2239 = vmul.f32 %v2234, %v2234
    %v2240 = vmul.f32 %v2237, %v2237
    %v2241 = vmul.f32 %v2234, %v2239
    %v2242 = vmul.f32 %v2237, %v2240
    %v2243 = vmul.f32 %v2241, 0.044715
    %v2244 = vmul.f32 %v2242, 0.044715
    %v2245 = vadd.f32 %v2234, %v2243
    %v2246 = vadd.f32 %v2237, %v2244
    %v2247 = vmul.f32 %v2245, 0.7978846
    %v2248 = vmul.f32 %v2246, 0.7978846
    %v2249 = vtanh.pop %v2247
    %v2250 = vtanh.pop %v2248
    %v2251 = vadd.f32 %v2249, 1.0
    %v2252 = vadd.f32 %v2250, 1.0
    %v2253 = vmul.f32 %v2251, 0.5
    %v2254 = vmul.f32 %v2252, 0.5
    %v2255 = vmul.f32 %v2234, %v2253
    %v2256 = vmul.f32 %v2237, %v2254
    %v2258 = vsel %vm1340, %v2255, 0
    %v2261 = vsel %vm1340, %v2256, 0
    %2263 = vmatpush.msra.mxu0 0.0
    %2264 = vmatpush.msra.mxu0 0.0
    %2265 = vmatpush.msra.mxu0 0.0
    %2266 = vmatpush.msra.mxu0 0.0
    %2267 = vmatpush.msra.mxu0 0.0
    %2268 = vmatpush.msra.mxu0 0.0
    %2269 = vmatpush.msra.mxu0 0.0
    %2270 = vmatpush.msra.mxu0 0.0
    %2271 = vmatpush.msra.mxu0 %v1490
    %2272 = vmatpush.msra.mxu0 %v1489
    %2273 = vmatpush.msra.mxu0 %v1488
    %2274 = vmatpush.msra.mxu0 %v1487
    %2275 = vmatpush.msra.mxu0 %v1486
    %2276 = vmatpush.msra.mxu0 %v1485
    %2277 = vmatpush.msra.mxu0 %v1484
    %2278 = vmatpush.msra.mxu0 %v1483
    %2279 = vmatmul.f32.gmra.mxu0 %v2258
    %v2280 = vpop.f32.mrf.mxu0
    %v2281 = vadd.f32 0.0, %v2280
    %2282 = vmatmul.f32.gmra.mxu0 %v2261
    %v2283 = vpop.f32.mrf.mxu0
    %v2284 = vadd.f32 0.0, %v2283
    %2285 = vdwg.mxu0
    %v2286 = vadd.f32 %v2157, %v2281
    %v2287 = vadd.f32 %v2158, %v2284
    %v2288 = vperm.slane %v59, 1
    %v2289 = vadd.f32 %v2286, %v2288
    %v2290 = vadd.f32 %v2287, %v2288
    %v2291 = vld [vmem:[%s14] sm:$0xff]
    %v2292 = vld [vmem:[%s14 + $0x8] sm:$0xff]
    %v2293 = vld [vmem:[%s14 + $0x10] sm:$0xff]
    %v2294 = vld [vmem:[%s14 + $0x18] sm:$0xff]
    %v2297 = vrot.slane %v2290, 7
    %v2298 = vsel %vm1425, %v2297, %v2289
    %v2299 = vsel %vm139, %v2298, 0
    %2301 = vmatpush.msra.mxu0 0.0
    %2302 = vmatpush.msra.mxu0 0.0
    %2303 = vmatpush.msra.mxu0 0.0
    %2304 = vmatpush.msra.mxu0 0.0
    %2305 = vmatpush.msra.mxu0 0.0
    %2306 = vmatpush.msra.mxu0 0.0
    %2307 = vmatpush.msra.mxu0 0.0
    %2308 = vmatpush.msra.mxu0 0.0
    %2309 = vmatpush.msra.mxu0 0.0
    %2310 = vmatpush.msra.mxu0 0.0
    %2311 = vmatpush.msra.mxu0 0.0
    %2312 = vmatpush.msra.mxu0 0.0
    %2313 = vmatpush.msra.mxu0 %v2294
    %2314 = vmatpush.msra.mxu0 %v2293
    %2315 = vmatpush.msra.mxu0 %v2292
    %2316 = vmatpush.msra.mxu0 %v2291
    %2317 = vmatmul.f32.gmra.mxu0 %v2299
    %v2318 = vpop.f32.mrf.mxu0
    %v2319 = vadd.f32 0.0, %v2318
    %2320 = vdwg.mxu0
    %v2321 = vmul.f32 %v2319, %v2319
    %v2322 = vsel %vm1450, %v2321, 0.0
    %2323 = vadd.xlane.f32.xlu0 %v2322
    %v2324 = vpop.xlane.xlu0 %2323
    %v2325 = vmax.f32 %v2324, 1e-24
    %v2326 = vrsqrt.pop %v2325
    %v2327 = vmul.f32 %v2326, %v2325
    %v2328 = vmul.f32 %v2327, %v2326
    %v2329 = vmul.f32 0.5, %v2328
    %v2330 = vsub.f32 1.5, %v2329
    %v2331 = vmul.f32 %v2326, %v2330
    %vm2332 = vweird.f32 %v2325
    %vm2333 = vweird.f32 %v2326
    %vm2334 = vmor %vm2332, %vm2333
    %v2335 = vsel %vm2334, %v2326, %v2331
    %v2336 = vmul.f32 %v2319, %v2335
    %2337 = vst.msk [vmem:[#allocation4] sm:$0x3] %vm1450, %v2336
    // Predicated region
    $region66: #{clip_forward.1} parent=1 // pred_check
      _
    $region67: #{clip_forward.1} parent=1 // pred_check_branch
      %2339 = sbr.rel (0) target = $region69
    $region68: #{clip_forward.1} parent=1 // pred_region
      %2341 = vsyncadd [#allocation3], 0
      %s2343 = sshll.u32 [#allocation2], 4
      %s2344 = int_to_ptr.vmem [resolvable:$true] %s2343
      %s2345 = sshll.u32 %s16, 4
      %s2346 = int_to_ptr.hbm [resolvable:$true] %s2345
      %2348 = dma.vmem_to_hbm [thread:$0]  %s2344, 32, %s2346, [#allocation3]
    $region69: #{clip_forward.1} parent=1 // pred_fallthru
      _
    // Predicated region
    $region70: #{clip_forward.1} parent=1 // pred_check
      _
    $region71: #{clip_forward.1} parent=1 // pred_check_branch
      %2350 = sbr.rel (0) target = $region73
    $region72: #{clip_forward.1} parent=1 // pred_region
      %2352 = vsyncadd [#allocation5], 0
      %s2354 = sshll.u32 [#allocation4], 4
      %s2355 = int_to_ptr.vmem [resolvable:$true] %s2354
      %s2356 = sshll.u32 %s17, 4
      %s2357 = int_to_ptr.hbm [resolvable:$true] %s2356
      %2359 = dma.vmem_to_hbm [thread:$0]  %s2355, 32, %s2357, [#allocation5]
    $region73: #{clip_forward.1} parent=1 // pred_fallthru
      _
    // Predicated region
    $region74: #{clip_forward.1} parent=1 // pred_check
      _
    $region75: #{clip_forward.1} parent=1 // pred_check_branch
      %2361 = sbr.rel (0) target = $region77
    $region76: #{clip_forward.1} parent=1 // pred_region
      %2363 = dma.done [#allocation3], 32
    $region77: #{clip_forward.1} parent=1 // pred_fallthru
      _
    // Predicated region
    $region78: #{clip_forward.1} parent=1 // pred_check
      _
    $region79: #{clip_forward.1} parent=1 // pred_check_branch
      %2365 = sbr.rel (0) target = $region81
    $region80: #{clip_forward.1} parent=1 // pred_region
      %2367 = dma.done [#allocation5], 32
    $region81: #{clip_forward.1} parent=1 // pred_fallthru
      _
    %2368 = vsyncpa [#allocation3], 1
    %2369 = vsyncpa [#allocation5], 1

</llo_original>
